<compile_context>
chip_gen: v7x
topology: tpu7x:2x2x1
jax: 0.10.0
libtpu: 0.0.40
codegen_flags: <defaults>
</compile_context>

<pallas_src>
import functools

import jax
import jax.numpy as jnp
from jax.experimental import pallas as pl
from jax.experimental.pallas import tpu as pltpu


# ----------------------------------------------------------------------------
# Fused kernel: per-batch QKV projection + per-head cosine-sim attention
#               + head merge + output projection.
# ----------------------------------------------------------------------------
def _fused_cos_attn_kernel(scale_ref, xq_ref, xk_ref, xv_ref,
                           wq_ref, wk_ref, wv_ref, wp_ref, bp_ref,
                           o_ref, *, n_head, d_head):
    f32 = jnp.float32

    # All-head projections: lane-dense (N, D) @ (D, H*Dh) on the MXU.
    q_all = jnp.dot(xq_ref[0], wq_ref[...], preferred_element_type=f32)
    k_all = jnp.dot(xk_ref[0], wk_ref[...], preferred_element_type=f32)
    v_all = jnp.dot(xv_ref[0], wv_ref[...], preferred_element_type=f32)

    eps_sq = 1e-24  # (1e-12)^2:  x * rsqrt(max(s, eps^2)) == x / max(sqrt(s), eps)
    head_outs = []
    for h in range(n_head):                         # static unroll over heads
        sl = slice(h * d_head, (h + 1) * d_head)    # static lane slice
        q = q_all[:, sl]
        k = k_all[:, sl]
        v = v_all[:, sl]

        # L2-normalise (rsqrt -> EUP slot); fold the per-head scale into q so
        # the scaling is O(N*Dh) instead of O(N^2).
        q_inv = jax.lax.rsqrt(jnp.maximum(jnp.sum(q * q, axis=-1, keepdims=True), eps_sq))
        k_inv = jax.lax.rsqrt(jnp.maximum(jnp.sum(k * k, axis=-1, keepdims=True), eps_sq))
        q = q * (q_inv * scale_ref[h])
        k = k * k_inv

        # Cosine-similarity scores: contract the last dims directly
        # (no explicit (Dh, N) transpose through the XLU).
        s = jax.lax.dot_general(q, k, (((1,), (1,)), ((), ())),
                                preferred_element_type=f32)           # (N, N)

        # Numerically-stable softmax; denominator via reciprocal.
        s = s - jnp.max(s, axis=-1, keepdims=True)
        e = jnp.exp(s)
        p = e * pl.reciprocal(jnp.sum(e, axis=-1, keepdims=True), approx=False)

        head_outs.append(jnp.dot(p, v, preferred_element_type=f32))   # (N, Dh)

    # 'b h n d -> b n (h d)' happens in-register; one lane-dense projection.
    merged = jnp.concatenate(head_outs, axis=-1)                      # (N, H*Dh)
    y = jnp.dot(merged, wp_ref[...], preferred_element_type=f32) + bp_ref[...]
    o_ref[0] = y.astype(o_ref.dtype)


def multi_head_cos_sim_attention(xq, xk, xv, params):
    """Pallas implementation of MultiHeadCosSimAttention.forward.

    xq, xk, xv : (B, N, D_model) float32
    returns    : (B, N, D_model) float32
    """
    wq, wk, wv = params["w_q"], params["w_k"], params["w_v"]          # (D, H*Dh)
    w_proj, b_proj = params["proj_w"], params["proj_b"]               # (H*Dh, D), (D,)
    logit_scale = params["logit_scale"]                               # (H, 1, 1)

    B, N, D = xq.shape
    HDh = wq.shape[1]
    H = logit_scale.shape[0]
    Dh = HDh // H

    # glue: clamp + exp of learned logit scale (torch.clamp(...).exp())
    scale = jnp.exp(jnp.minimum(logit_scale, jnp.log(1.0 / 0.01)))
    scale = scale.reshape(H).astype(jnp.float32)

    kernel = functools.partial(_fused_cos_attn_kernel, n_head=H, d_head=Dh)

    cost = pl.CostEstimate(
        flops=B * (8 * N * D * HDh + 4 * N * N * HDh),
        transcendentals=B * H * N * (N + 2),
        bytes_accessed=4 * (4 * B * N * D + 4 * D * HDh + D + H),
    )

    out = pl.pallas_call(
        kernel,
        out_shape=jax.ShapeDtypeStruct((B, N, D), jnp.float32),
        grid=(B,),
        in_specs=[
            pl.BlockSpec(memory_space=pltpu.MemorySpace.SMEM),        # scale (H,)
            pl.BlockSpec((1, N, D), lambda b: (b, 0, 0)),             # xq
            pl.BlockSpec((1, N, D), lambda b: (b, 0, 0)),             # xk
            pl.BlockSpec((1, N, D), lambda b: (b, 0, 0)),             # xv
            pl.BlockSpec((D, HDh), lambda b: (0, 0)),                 # Wq (resident)
            pl.BlockSpec((D, HDh), lambda b: (0, 0)),                 # Wk (resident)
            pl.BlockSpec((D, HDh), lambda b: (0, 0)),                 # Wv (resident)
            pl.BlockSpec((HDh, D), lambda b: (0, 0)),                 # W_proj (resident)
            pl.BlockSpec((1, D), lambda b: (0, 0)),                   # b_proj
        ],
        out_specs=pl.BlockSpec((1, N, D), lambda b: (b, 0, 0)),
        compiler_params=pltpu.CompilerParams(
            dimension_semantics=("parallel",)),
        cost_estimate=cost,
    )(scale, xq, xk, xv, wq, wk, wv, w_proj, b_proj.reshape(1, D))

    return out


# ----------------------------------------------------------------------------
# Pure-JAX reference (mirrors the PyTorch forward) for correctness checking
# ----------------------------------------------------------------------------
def _reference(xq, xk, xv, params, H, Dh):
    def heads(x, w):
        B, N, _ = x.shape
        return jnp.transpose((x @ w).reshape(B, N, H, Dh), (0, 2, 1, 3))
    q = heads(xq, params["w_q"])
    k = heads(xk, params["w_k"])
    v = heads(xv, params["w_v"])
    q = q / jnp.maximum(jnp.linalg.norm(q, axis=-1, keepdims=True), 1e-12)
    k = k / jnp.maximum(jnp.linalg.norm(k, axis=-1, keepdims=True), 1e-12)
    scale = jnp.exp(jnp.minimum(params["logit_scale"], jnp.log(1.0 / 0.01)))  # (H,1,1)
    attn = jnp.einsum("bhid,bhjd->bhij", q, k) * scale[None]
    attn = jax.nn.softmax(attn, axis=-1)
    out = jnp.einsum("bhij,bhjd->bhid", attn, v)
    B, _, N, _ = out.shape
    out = jnp.transpose(out, (0, 2, 1, 3)).reshape(B, N, H * Dh)
    return out @ params["proj_w"] + params["proj_b"]


def _init_params(key, d_model, n_head, d_head):
    """Deterministic init: trunc-normal(std=0.02) weights, zero bias, log(10) scale."""
    ks = jax.random.split(key, 5)
    def tn(k, shape):
        return (jax.random.truncated_normal(k, -2.0, 2.0, shape, jnp.float32) * 0.02)
    return {
        "w_q": tn(ks[0], (d_model, n_head * d_head)),
        "w_k": tn(ks[1], (d_model, n_head * d_head)),
        "w_v": tn(ks[2], (d_model, n_head * d_head)),
        "proj_w": tn(ks[3], (n_head * d_head, d_model)),
        "proj_b": jnp.zeros((d_model,), jnp.float32),
        "logit_scale": jnp.full((n_head, 1, 1), jnp.log(10.0), jnp.float32),
    }


if __name__ == "__main__":
    B, N, D_MODEL, N_HEAD, D_HEAD = 2, 16, 64, 4, 32

    key = jax.random.PRNGKey(0)
    kq, kk, kv, kp = jax.random.split(key, 4)
    xq = jax.random.normal(kq, (B, N, D_MODEL), jnp.float32)
    xk = jax.random.normal(kk, (B, N, D_MODEL), jnp.float32)
    xv = jax.random.normal(kv, (B, N, D_MODEL), jnp.float32)
    params = _init_params(kp, D_MODEL, N_HEAD, D_HEAD)

    out = multi_head_cos_sim_attention(xq, xk, xv, params)
    out = jax.block_until_ready(out)

    ref = _reference(xq, xk, xv, params, N_HEAD, D_HEAD)
    assert out.shape == (B, N, D_MODEL)
    assert jnp.allclose(out, ref, atol=1e-4, rtol=1e-4), "mismatch vs reference"

    print("KERNEL_OK")
</pallas_src>

<mosaic_0001>
module attributes {stable_mosaic.version = 11 : i64} {
  func.func @_fused_cos_attn_kernel(%arg0: i32, %arg1: memref<4xf32, #tpu.memory_space<smem>>, %arg2: memref<1x16x64xf32, #tpu.memory_space<vmem>>, %arg3: memref<1x16x64xf32, #tpu.memory_space<vmem>>, %arg4: memref<1x16x64xf32, #tpu.memory_space<vmem>>, %arg5: memref<64x128xf32, #tpu.memory_space<vmem>>, %arg6: memref<64x128xf32, #tpu.memory_space<vmem>>, %arg7: memref<64x128xf32, #tpu.memory_space<vmem>>, %arg8: memref<128x64xf32, #tpu.memory_space<vmem>>, %arg9: memref<1x64xf32, #tpu.memory_space<vmem>>, %arg10: memref<1x16x64xf32, #tpu.memory_space<vmem>>) attributes {dimension_semantics = [#tpu.dimension_semantics<parallel>], iteration_bounds = array<i64: 2>, scalar_prefetch = 0 : i64, scratch_operands = 0 : i64, tpu.core_type = #tpu.core_type<tc>, window_params = [{transform_indices = @transform_0, window_bounds = array<i64: 4>}, {transform_indices = @transform_1, window_bounds = array<i64: 1, 16, 64>}, {transform_indices = @transform_2, window_bounds = array<i64: 1, 16, 64>}, {transform_indices = @transform_3, window_bounds = array<i64: 1, 16, 64>}, {pipeline_mode = #tpu.pipeline_mode<synchronous>, transform_indices = @transform_4, window_bounds = array<i64: 64, 128>}, {pipeline_mode = #tpu.pipeline_mode<synchronous>, transform_indices = @transform_5, window_bounds = array<i64: 64, 128>}, {pipeline_mode = #tpu.pipeline_mode<synchronous>, transform_indices = @transform_6, window_bounds = array<i64: 64, 128>}, {pipeline_mode = #tpu.pipeline_mode<synchronous>, transform_indices = @transform_7, window_bounds = array<i64: 128, 64>}, {pipeline_mode = #tpu.pipeline_mode<synchronous>, transform_indices = @transform_8, window_bounds = array<i64: 1, 64>}, {transform_indices = @transform_9, window_bounds = array<i64: 1, 16, 64>}]} {
    %c0 = arith.constant 0 : index
    %c0_0 = arith.constant 0 : index
    %c0_1 = arith.constant 0 : index
    %0 = vector.load %arg2[%c0, %c0_0, %c0_1] : memref<1x16x64xf32, #tpu.memory_space<vmem>>, vector<1x16x64xf32>
    %1 = vector.shape_cast %0 : vector<1x16x64xf32> to vector<16x64xf32>
    %c0_2 = arith.constant 0 : index
    %c0_3 = arith.constant 0 : index
    %2 = vector.load %arg5[%c0_2, %c0_3] : memref<64x128xf32, #tpu.memory_space<vmem>>, vector<64x128xf32>
    %cst = arith.constant dense<0.000000e+00> : vector<16x128xf32>
    %3 = tpu.matmul %1, %2, %cst {dimension_numbers = #tpu.dot_dimension_numbers<[1], [0], [0], [1], [0, 0, 1, 1], [], []>} : vector<16x64xf32>, vector<64x128xf32>, vector<16x128xf32> -> vector<16x128xf32>
    %c0_4 = arith.constant 0 : index
    %c0_5 = arith.constant 0 : index
    %c0_6 = arith.constant 0 : index
    %4 = vector.load %arg3[%c0_4, %c0_5, %c0_6] : memref<1x16x64xf32, #tpu.memory_space<vmem>>, vector<1x16x64xf32>
    %5 = vector.shape_cast %4 : vector<1x16x64xf32> to vector<16x64xf32>
    %c0_7 = arith.constant 0 : index
    %c0_8 = arith.constant 0 : index
    %6 = vector.load %arg6[%c0_7, %c0_8] : memref<64x128xf32, #tpu.memory_space<vmem>>, vector<64x128xf32>
    %cst_9 = arith.constant dense<0.000000e+00> : vector<16x128xf32>
    %7 = tpu.matmul %5, %6, %cst_9 {dimension_numbers = #tpu.dot_dimension_numbers<[1], [0], [0], [1], [0, 0, 1, 1], [], []>} : vector<16x64xf32>, vector<64x128xf32>, vector<16x128xf32> -> vector<16x128xf32>
    %c0_10 = arith.constant 0 : index
    %c0_11 = arith.constant 0 : index
    %c0_12 = arith.constant 0 : index
    %8 = vector.load %arg4[%c0_10, %c0_11, %c0_12] : memref<1x16x64xf32, #tpu.memory_space<vmem>>, vector<1x16x64xf32>
    %9 = vector.shape_cast %8 : vector<1x16x64xf32> to vector<16x64xf32>
    %c0_13 = arith.constant 0 : index
    %c0_14 = arith.constant 0 : index
    %10 = vector.load %arg7[%c0_13, %c0_14] : memref<64x128xf32, #tpu.memory_space<vmem>>, vector<64x128xf32>
    %cst_15 = arith.constant dense<0.000000e+00> : vector<16x128xf32>
    %11 = tpu.matmul %9, %10, %cst_15 {dimension_numbers = #tpu.dot_dimension_numbers<[1], [0], [0], [1], [0, 0, 1, 1], [], []>} : vector<16x64xf32>, vector<64x128xf32>, vector<16x128xf32> -> vector<16x128xf32>
    %12 = vector.extract_strided_slice %3 {offsets = [0, 0], sizes = [16, 32], strides = [1, 1]} : vector<16x128xf32> to vector<16x32xf32>
    %13 = vector.extract_strided_slice %7 {offsets = [0, 0], sizes = [16, 32], strides = [1, 1]} : vector<16x128xf32> to vector<16x32xf32>
    %14 = vector.extract_strided_slice %11 {offsets = [0, 0], sizes = [16, 32], strides = [1, 1]} : vector<16x128xf32> to vector<16x32xf32>
    %15 = arith.mulf %12, %12 : vector<16x32xf32>
    %cst_16 = arith.constant dense<0.000000e+00> : vector<16xf32>
    %16 = vector.multi_reduction <add>, %15, %cst_16 [1] : vector<16x32xf32> to vector<16xf32>
    %17 = vector.shape_cast %16 : vector<16xf32> to vector<16x1xf32>
    %cst_17 = arith.constant 1.000000e-24 : f32
    %18 = vector.broadcast %cst_17 : f32 to vector<16x1xf32>
    %19 = arith.maximumf %17, %18 : vector<16x1xf32>
    %20 = math.rsqrt %19 : vector<16x1xf32>
    %21 = arith.mulf %13, %13 : vector<16x32xf32>
    %cst_18 = arith.constant dense<0.000000e+00> : vector<16xf32>
    %22 = vector.multi_reduction <add>, %21, %cst_18 [1] : vector<16x32xf32> to vector<16xf32>
    %23 = vector.shape_cast %22 : vector<16xf32> to vector<16x1xf32>
    %cst_19 = arith.constant 1.000000e-24 : f32
    %24 = vector.broadcast %cst_19 : f32 to vector<16x1xf32>
    %25 = arith.maximumf %23, %24 : vector<16x1xf32>
    %26 = math.rsqrt %25 : vector<16x1xf32>
    %c0_20 = arith.constant 0 : index
    %27 = memref.load %arg1[%c0_20] : memref<4xf32, #tpu.memory_space<smem>>
    %28 = vector.broadcast %27 : f32 to vector<16x1xf32>
    %29 = arith.mulf %20, %28 : vector<16x1xf32>
    %30 = vector.broadcast %29 : vector<16x1xf32> to vector<16x32xf32>
    %31 = arith.mulf %12, %30 : vector<16x32xf32>
    %32 = vector.broadcast %26 : vector<16x1xf32> to vector<16x32xf32>
    %33 = arith.mulf %13, %32 : vector<16x32xf32>
    %cst_21 = arith.constant dense<0.000000e+00> : vector<16x16xf32>
    %34 = tpu.matmul %31, %33, %cst_21 {dimension_numbers = #tpu.dot_dimension_numbers<[1], [1], [0], [0], [0, 0, 1, 0], [], []>} : vector<16x32xf32>, vector<16x32xf32>, vector<16x16xf32> -> vector<16x16xf32>
    %cst_22 = arith.constant dense<0xFF800000> : vector<16xf32>
    %35 = vector.multi_reduction <maximumf>, %34, %cst_22 [1] : vector<16x16xf32> to vector<16xf32>
    %36 = vector.shape_cast %35 : vector<16xf32> to vector<16x1xf32>
    %37 = vector.broadcast %36 : vector<16x1xf32> to vector<16x16xf32>
    %38 = arith.subf %34, %37 : vector<16x16xf32>
    %39 = math.exp %38 : vector<16x16xf32>
    %cst_23 = arith.constant dense<0.000000e+00> : vector<16xf32>
    %40 = vector.multi_reduction <add>, %39, %cst_23 [1] : vector<16x16xf32> to vector<16xf32>
    %41 = vector.shape_cast %40 : vector<16xf32> to vector<16x1xf32>
    %42 = tpu.reciprocal %41 : vector<16x1xf32> -> vector<16x1xf32>
    %43 = vector.broadcast %42 : vector<16x1xf32> to vector<16x16xf32>
    %44 = arith.mulf %39, %43 : vector<16x16xf32>
    %cst_24 = arith.constant dense<0.000000e+00> : vector<16x32xf32>
    %45 = tpu.matmul %44, %14, %cst_24 {dimension_numbers = #tpu.dot_dimension_numbers<[1], [0], [0], [1], [0, 0, 1, 1], [], []>} : vector<16x16xf32>, vector<16x32xf32>, vector<16x32xf32> -> vector<16x32xf32>
    %46 = vector.extract_strided_slice %3 {offsets = [0, 32], sizes = [16, 32], strides = [1, 1]} : vector<16x128xf32> to vector<16x32xf32>
    %47 = vector.extract_strided_slice %7 {offsets = [0, 32], sizes = [16, 32], strides = [1, 1]} : vector<16x128xf32> to vector<16x32xf32>
    %48 = vector.extract_strided_slice %11 {offsets = [0, 32], sizes = [16, 32], strides = [1, 1]} : vector<16x128xf32> to vector<16x32xf32>
    %49 = arith.mulf %46, %46 : vector<16x32xf32>
    %cst_25 = arith.constant dense<0.000000e+00> : vector<16xf32>
    %50 = vector.multi_reduction <add>, %49, %cst_25 [1] : vector<16x32xf32> to vector<16xf32>
    %51 = vector.shape_cast %50 : vector<16xf32> to vector<16x1xf32>
    %cst_26 = arith.constant 1.000000e-24 : f32
    %52 = vector.broadcast %cst_26 : f32 to vector<16x1xf32>
    %53 = arith.maximumf %51, %52 : vector<16x1xf32>
    %54 = math.rsqrt %53 : vector<16x1xf32>
    %55 = arith.mulf %47, %47 : vector<16x32xf32>
    %cst_27 = arith.constant dense<0.000000e+00> : vector<16xf32>
    %56 = vector.multi_reduction <add>, %55, %cst_27 [1] : vector<16x32xf32> to vector<16xf32>
    %57 = vector.shape_cast %56 : vector<16xf32> to vector<16x1xf32>
    %cst_28 = arith.constant 1.000000e-24 : f32
    %58 = vector.broadcast %cst_28 : f32 to vector<16x1xf32>
    %59 = arith.maximumf %57, %58 : vector<16x1xf32>
    %60 = math.rsqrt %59 : vector<16x1xf32>
    %c1 = arith.constant 1 : index
    %61 = memref.load %arg1[%c1] : memref<4xf32, #tpu.memory_space<smem>>
    %62 = vector.broadcast %61 : f32 to vector<16x1xf32>
    %63 = arith.mulf %54, %62 : vector<16x1xf32>
    %64 = vector.broadcast %63 : vector<16x1xf32> to vector<16x32xf32>
    %65 = arith.mulf %46, %64 : vector<16x32xf32>
    %66 = vector.broadcast %60 : vector<16x1xf32> to vector<16x32xf32>
    %67 = arith.mulf %47, %66 : vector<16x32xf32>
    %cst_29 = arith.constant dense<0.000000e+00> : vector<16x16xf32>
    %68 = tpu.matmul %65, %67, %cst_29 {dimension_numbers = #tpu.dot_dimension_numbers<[1], [1], [0], [0], [0, 0, 1, 0], [], []>} : vector<16x32xf32>, vector<16x32xf32>, vector<16x16xf32> -> vector<16x16xf32>
    %cst_30 = arith.constant dense<0xFF800000> : vector<16xf32>
    %69 = vector.multi_reduction <maximumf>, %68, %cst_30 [1] : vector<16x16xf32> to vector<16xf32>
    %70 = vector.shape_cast %69 : vector<16xf32> to vector<16x1xf32>
    %71 = vector.broadcast %70 : vector<16x1xf32> to vector<16x16xf32>
    %72 = arith.subf %68, %71 : vector<16x16xf32>
    %73 = math.exp %72 : vector<16x16xf32>
    %cst_31 = arith.constant dense<0.000000e+00> : vector<16xf32>
    %74 = vector.multi_reduction <add>, %73, %cst_31 [1] : vector<16x16xf32> to vector<16xf32>
    %75 = vector.shape_cast %74 : vector<16xf32> to vector<16x1xf32>
    %76 = tpu.reciprocal %75 : vector<16x1xf32> -> vector<16x1xf32>
    %77 = vector.broadcast %76 : vector<16x1xf32> to vector<16x16xf32>
    %78 = arith.mulf %73, %77 : vector<16x16xf32>
    %cst_32 = arith.constant dense<0.000000e+00> : vector<16x32xf32>
    %79 = tpu.matmul %78, %48, %cst_32 {dimension_numbers = #tpu.dot_dimension_numbers<[1], [0], [0], [1], [0, 0, 1, 1], [], []>} : vector<16x16xf32>, vector<16x32xf32>, vector<16x32xf32> -> vector<16x32xf32>
    %80 = vector.extract_strided_slice %3 {offsets = [0, 64], sizes = [16, 32], strides = [1, 1]} : vector<16x128xf32> to vector<16x32xf32>
    %81 = vector.extract_strided_slice %7 {offsets = [0, 64], sizes = [16, 32], strides = [1, 1]} : vector<16x128xf32> to vector<16x32xf32>
    %82 = vector.extract_strided_slice %11 {offsets = [0, 64], sizes = [16, 32], strides = [1, 1]} : vector<16x128xf32> to vector<16x32xf32>
    %83 = arith.mulf %80, %80 : vector<16x32xf32>
    %cst_33 = arith.constant dense<0.000000e+00> : vector<16xf32>
    %84 = vector.multi_reduction <add>, %83, %cst_33 [1] : vector<16x32xf32> to vector<16xf32>
    %85 = vector.shape_cast %84 : vector<16xf32> to vector<16x1xf32>
    %cst_34 = arith.constant 1.000000e-24 : f32
    %86 = vector.broadcast %cst_34 : f32 to vector<16x1xf32>
    %87 = arith.maximumf %85, %86 : vector<16x1xf32>
    %88 = math.rsqrt %87 : vector<16x1xf32>
    %89 = arith.mulf %81, %81 : vector<16x32xf32>
    %cst_35 = arith.constant dense<0.000000e+00> : vector<16xf32>
    %90 = vector.multi_reduction <add>, %89, %cst_35 [1] : vector<16x32xf32> to vector<16xf32>
    %91 = vector.shape_cast %90 : vector<16xf32> to vector<16x1xf32>
    %cst_36 = arith.constant 1.000000e-24 : f32
    %92 = vector.broadcast %cst_36 : f32 to vector<16x1xf32>
    %93 = arith.maximumf %91, %92 : vector<16x1xf32>
    %94 = math.rsqrt %93 : vector<16x1xf32>
    %c2 = arith.constant 2 : index
    %95 = memref.load %arg1[%c2] : memref<4xf32, #tpu.memory_space<smem>>
    %96 = vector.broadcast %95 : f32 to vector<16x1xf32>
    %97 = arith.mulf %88, %96 : vector<16x1xf32>
    %98 = vector.broadcast %97 : vector<16x1xf32> to vector<16x32xf32>
    %99 = arith.mulf %80, %98 : vector<16x32xf32>
    %100 = vector.broadcast %94 : vector<16x1xf32> to vector<16x32xf32>
    %101 = arith.mulf %81, %100 : vector<16x32xf32>
    %cst_37 = arith.constant dense<0.000000e+00> : vector<16x16xf32>
    %102 = tpu.matmul %99, %101, %cst_37 {dimension_numbers = #tpu.dot_dimension_numbers<[1], [1], [0], [0], [0, 0, 1, 0], [], []>} : vector<16x32xf32>, vector<16x32xf32>, vector<16x16xf32> -> vector<16x16xf32>
    %cst_38 = arith.constant dense<0xFF800000> : vector<16xf32>
    %103 = vector.multi_reduction <maximumf>, %102, %cst_38 [1] : vector<16x16xf32> to vector<16xf32>
    %104 = vector.shape_cast %103 : vector<16xf32> to vector<16x1xf32>
    %105 = vector.broadcast %104 : vector<16x1xf32> to vector<16x16xf32>
    %106 = arith.subf %102, %105 : vector<16x16xf32>
    %107 = math.exp %106 : vector<16x16xf32>
    %cst_39 = arith.constant dense<0.000000e+00> : vector<16xf32>
    %108 = vector.multi_reduction <add>, %107, %cst_39 [1] : vector<16x16xf32> to vector<16xf32>
    %109 = vector.shape_cast %108 : vector<16xf32> to vector<16x1xf32>
    %110 = tpu.reciprocal %109 : vector<16x1xf32> -> vector<16x1xf32>
    %111 = vector.broadcast %110 : vector<16x1xf32> to vector<16x16xf32>
    %112 = arith.mulf %107, %111 : vector<16x16xf32>
    %cst_40 = arith.constant dense<0.000000e+00> : vector<16x32xf32>
    %113 = tpu.matmul %112, %82, %cst_40 {dimension_numbers = #tpu.dot_dimension_numbers<[1], [0], [0], [1], [0, 0, 1, 1], [], []>} : vector<16x16xf32>, vector<16x32xf32>, vector<16x32xf32> -> vector<16x32xf32>
    %114 = vector.extract_strided_slice %3 {offsets = [0, 96], sizes = [16, 32], strides = [1, 1]} : vector<16x128xf32> to vector<16x32xf32>
    %115 = vector.extract_strided_slice %7 {offsets = [0, 96], sizes = [16, 32], strides = [1, 1]} : vector<16x128xf32> to vector<16x32xf32>
    %116 = vector.extract_strided_slice %11 {offsets = [0, 96], sizes = [16, 32], strides = [1, 1]} : vector<16x128xf32> to vector<16x32xf32>
    %117 = arith.mulf %114, %114 : vector<16x32xf32>
    %cst_41 = arith.constant dense<0.000000e+00> : vector<16xf32>
    %118 = vector.multi_reduction <add>, %117, %cst_41 [1] : vector<16x32xf32> to vector<16xf32>
    %119 = vector.shape_cast %118 : vector<16xf32> to vector<16x1xf32>
    %cst_42 = arith.constant 1.000000e-24 : f32
    %120 = vector.broadcast %cst_42 : f32 to vector<16x1xf32>
    %121 = arith.maximumf %119, %120 : vector<16x1xf32>
    %122 = math.rsqrt %121 : vector<16x1xf32>
    %123 = arith.mulf %115, %115 : vector<16x32xf32>
    %cst_43 = arith.constant dense<0.000000e+00> : vector<16xf32>
    %124 = vector.multi_reduction <add>, %123, %cst_43 [1] : vector<16x32xf32> to vector<16xf32>
    %125 = vector.shape_cast %124 : vector<16xf32> to vector<16x1xf32>
    %cst_44 = arith.constant 1.000000e-24 : f32
    %126 = vector.broadcast %cst_44 : f32 to vector<16x1xf32>
    %127 = arith.maximumf %125, %126 : vector<16x1xf32>
    %128 = math.rsqrt %127 : vector<16x1xf32>
    %c3 = arith.constant 3 : index
    %129 = memref.load %arg1[%c3] : memref<4xf32, #tpu.memory_space<smem>>
    %130 = vector.broadcast %129 : f32 to vector<16x1xf32>
    %131 = arith.mulf %122, %130 : vector<16x1xf32>
    %132 = vector.broadcast %131 : vector<16x1xf32> to vector<16x32xf32>
    %133 = arith.mulf %114, %132 : vector<16x32xf32>
    %134 = vector.broadcast %128 : vector<16x1xf32> to vector<16x32xf32>
    %135 = arith.mulf %115, %134 : vector<16x32xf32>
    %cst_45 = arith.constant dense<0.000000e+00> : vector<16x16xf32>
    %136 = tpu.matmul %133, %135, %cst_45 {dimension_numbers = #tpu.dot_dimension_numbers<[1], [1], [0], [0], [0, 0, 1, 0], [], []>} : vector<16x32xf32>, vector<16x32xf32>, vector<16x16xf32> -> vector<16x16xf32>
    %cst_46 = arith.constant dense<0xFF800000> : vector<16xf32>
    %137 = vector.multi_reduction <maximumf>, %136, %cst_46 [1] : vector<16x16xf32> to vector<16xf32>
    %138 = vector.shape_cast %137 : vector<16xf32> to vector<16x1xf32>
    %139 = vector.broadcast %138 : vector<16x1xf32> to vector<16x16xf32>
    %140 = arith.subf %136, %139 : vector<16x16xf32>
    %141 = math.exp %140 : vector<16x16xf32>
    %cst_47 = arith.constant dense<0.000000e+00> : vector<16xf32>
    %142 = vector.multi_reduction <add>, %141, %cst_47 [1] : vector<16x16xf32> to vector<16xf32>
    %143 = vector.shape_cast %142 : vector<16xf32> to vector<16x1xf32>
    %144 = tpu.reciprocal %143 : vector<16x1xf32> -> vector<16x1xf32>
    %145 = vector.broadcast %144 : vector<16x1xf32> to vector<16x16xf32>
    %146 = arith.mulf %141, %145 : vector<16x16xf32>
    %cst_48 = arith.constant dense<0.000000e+00> : vector<16x32xf32>
    %147 = tpu.matmul %146, %116, %cst_48 {dimension_numbers = #tpu.dot_dimension_numbers<[1], [0], [0], [1], [0, 0, 1, 1], [], []>} : vector<16x16xf32>, vector<16x32xf32>, vector<16x32xf32> -> vector<16x32xf32>
    %148 = tpu.concatenate %45, %79, %113, %147 in 1 : vector<16x32xf32>, vector<16x32xf32>, vector<16x32xf32>, vector<16x32xf32> -> vector<16x128xf32>
    %c0_49 = arith.constant 0 : index
    %c0_50 = arith.constant 0 : index
    %149 = vector.load %arg8[%c0_49, %c0_50] : memref<128x64xf32, #tpu.memory_space<vmem>>, vector<128x64xf32>
    %cst_51 = arith.constant dense<0.000000e+00> : vector<16x64xf32>
    %150 = tpu.matmul %148, %149, %cst_51 {dimension_numbers = #tpu.dot_dimension_numbers<[1], [0], [0], [1], [0, 0, 1, 1], [], []>} : vector<16x128xf32>, vector<128x64xf32>, vector<16x64xf32> -> vector<16x64xf32>
    %c0_52 = arith.constant 0 : index
    %c0_53 = arith.constant 0 : index
    %151 = vector.load %arg9[%c0_52, %c0_53] : memref<1x64xf32, #tpu.memory_space<vmem>>, vector<1x64xf32>
    %152 = vector.broadcast %151 : vector<1x64xf32> to vector<16x64xf32>
    %153 = arith.addf %150, %152 : vector<16x64xf32>
    %c0_54 = arith.constant 0 : index
    %c0_55 = arith.constant 0 : index
    %c0_56 = arith.constant 0 : index
    %154 = vector.load %arg10[%c0_54, %c0_55, %c0_56] : memref<1x16x64xf32, #tpu.memory_space<vmem>>, vector<1x16x64xf32>
    %155 = vector.shape_cast %154 : vector<1x16x64xf32> to vector<16x64xf32>
    %156 = vector.shape_cast %153 : vector<16x64xf32> to vector<1x16x64xf32>
    tpu.vector_store %arg10[%c0_54, %c0_55, %c0_56], %156 {strides = array<i32>} : memref<1x16x64xf32, #tpu.memory_space<vmem>>, vector<1x16x64xf32>,
    return
  }
  func.func @transform_0(%arg0: i32) -> i32 {
    %c0_i32 = arith.constant 0 : i32
    %c0_i32_0 = arith.constant 0 : i32
    return %c0_i32 : i32
  }
  func.func @transform_1(%arg0: i32) -> (i32, i32, i32) {
    %c0_i32 = arith.constant 0 : i32
    %c0_i32_0 = arith.constant 0 : i32
    %c0_i32_1 = arith.constant 0 : i32
    return %arg0, %c0_i32, %c0_i32_0 : i32, i32, i32
  }
  func.func @transform_2(%arg0: i32) -> (i32, i32, i32) {
    %c0_i32 = arith.constant 0 : i32
    %c0_i32_0 = arith.constant 0 : i32
    %c0_i32_1 = arith.constant 0 : i32
    return %arg0, %c0_i32, %c0_i32_0 : i32, i32, i32
  }
  func.func @transform_3(%arg0: i32) -> (i32, i32, i32) {
    %c0_i32 = arith.constant 0 : i32
    %c0_i32_0 = arith.constant 0 : i32
    %c0_i32_1 = arith.constant 0 : i32
    return %arg0, %c0_i32, %c0_i32_0 : i32, i32, i32
  }
  func.func @transform_4(%arg0: i32) -> (i32, i32) {
    %c0_i32 = arith.constant 0 : i32
    %c0_i32_0 = arith.constant 0 : i32
    %c0_i32_1 = arith.constant 0 : i32
    return %c0_i32, %c0_i32_0 : i32, i32
  }
  func.func @transform_5(%arg0: i32) -> (i32, i32) {
    %c0_i32 = arith.constant 0 : i32
    %c0_i32_0 = arith.constant 0 : i32
    %c0_i32_1 = arith.constant 0 : i32
    return %c0_i32, %c0_i32_0 : i32, i32
  }
  func.func @transform_6(%arg0: i32) -> (i32, i32) {
    %c0_i32 = arith.constant 0 : i32
    %c0_i32_0 = arith.constant 0 : i32
    %c0_i32_1 = arith.constant 0 : i32
    return %c0_i32, %c0_i32_0 : i32, i32
  }
  func.func @transform_7(%arg0: i32) -> (i32, i32) {
    %c0_i32 = arith.constant 0 : i32
    %c0_i32_0 = arith.constant 0 : i32
    %c0_i32_1 = arith.constant 0 : i32
    return %c0_i32, %c0_i32_0 : i32, i32
  }
  func.func @transform_8(%arg0: i32) -> (i32, i32) {
    %c0_i32 = arith.constant 0 : i32
    %c0_i32_0 = arith.constant 0 : i32
    %c0_i32_1 = arith.constant 0 : i32
    return %c0_i32, %c0_i32_0 : i32, i32
  }
  func.func @transform_9(%arg0: i32) -> (i32, i32, i32) {
    %c0_i32 = arith.constant 0 : i32
    %c0_i32_0 = arith.constant 0 : i32
    %c0_i32_1 = arith.constant 0 : i32
    return %arg0, %c0_i32, %c0_i32_0 : i32, i32, i32
  }
}

</mosaic_0001>

<llo_original>
// kernel: tpu_custom_call.1
$region0: #{tpu_custom_call.1}
  #allocation0 [shape = 'u32[]', space=smem, size = 0x4, offset = 0x4, fixed_abs, tag = 'smem constant byte address 0x4 - core index']
  #allocation1 [shape = 'u32[144,128]{1,0:T(1,128)}', space=vmem, size = 0x12000, scoped, tag = 'internal scratch']
  %s0 = inlined_call_operand.hbm [shape: f32[4], index: 0, kind: input, shape index: {}]
  %s1 = inlined_call_operand.hbm [shape: f32[2,16,64], index: 1, kind: input, shape index: {}]
  %s2 = inlined_call_operand.hbm [shape: f32[2,16,64], index: 2, kind: input, shape index: {}]
  %s3 = inlined_call_operand.hbm [shape: f32[2,16,64], index: 3, kind: input, shape index: {}]
  %s4 = inlined_call_operand.vmem [shape: f32[64,128], index: 4, kind: input, shape index: {}]
  %s5 = inlined_call_operand.vmem [shape: f32[64,128], index: 5, kind: input, shape index: {}]
  %s6 = inlined_call_operand.vmem [shape: f32[64,128], index: 6, kind: input, shape index: {}]
  %s7 = inlined_call_operand.vmem [shape: f32[128,64], index: 7, kind: input, shape index: {}]
  %s8 = inlined_call_operand.vmem [shape: f32[1,64], index: 8, kind: input, shape index: {}]
  %s9 = inlined_call_operand.hbm [shape: f32[2,16,64], index: 9, kind: output, shape index: {}]
  %s10 = sld [smem:[#allocation0]]
  $region85: #{tpu_custom_call.1} parent=0
    _
  %s12 = ssub.s32 1, %s10
  %s13 = scalar_select 0, %s12, %s10
  $region1: #{tpu_custom_call.1} parent=0
    #allocation2 [shape = 'u8[512]{0}', space=smem, size = 0x200, scoped, tag = 'input window, operand 0, single buffered']
    #allocation3 [shape = 's32[2]{0}', space=sflag, size = 0x8, scoped, tag = 'scoped memory for tpu_custom_call.1']
    #allocation4 [shape = 's32[2]{0}', space=sflag, size = 0x8, scoped, tag = 'scoped memory for tpu_custom_call.1']
    #allocation5 [shape = 's32[2]{0}', space=sflag, size = 0x8, scoped, tag = 'scoped memory for tpu_custom_call.1']
    #allocation6 [shape = 'u8[16384]{0}', space=vmem, size = 0x4000, scoped, tag = 'input window, operand 1']
    #allocation7 [shape = 'u8[16384]{0}', space=vmem, size = 0x4000, scoped, tag = 'input window, operand 2']
    #allocation8 [shape = 's32[2]{0}', space=sflag, size = 0x8, scoped, tag = 'scoped memory for tpu_custom_call.1']
    #allocation9 [shape = 'u8[16384]{0}', space=vmem, size = 0x4000, scoped, tag = 'input window, operand 3']
    #allocation10 [shape = 'u8[16384]{0}', space=vmem, size = 0x4000, scoped, tag = 'output window, operand 0']
    %14 = vsyncpa [#allocation5], 0
    %15 = vsyncpa [#allocation3], 0
    %s16 = scalar_lea.sflag [#allocation3], 1
    %17 = vsyncpa %s16, 0
    %18 = vsyncpa [#allocation8], 0
    %s19 = scalar_lea.sflag [#allocation8], 1
    %20 = vsyncpa %s19, 0
    %21 = vsyncpa [#allocation4], 0
    %s22 = scalar_lea.sflag [#allocation4], 1
    %23 = vsyncpa %s22, 0
    loop: start=0, step=1, limit=4
    $region2: #{tpu_custom_call.1} parent=1 // loop_pre_header
      _
    $region3: #{tpu_custom_call.1} parent=1 // loop_header
      %s25 = sphi 0, %s29
      %p26 = scmp.ge.s32.totalorder %s25, 4
      %s33 = sphi 0, %s33
      %s35 = sphi 0, %s33
      %s36 = sphi 0, %s35
      %s50 = sphi 0, %s36
      %s56 = sphi 0, %s58
      %s59 = sphi 0, %s56
      %s60 = sphi 0, %s59
      %s76 = sphi 0, %s60
      %s82 = sphi 0, %s84
      %s85 = sphi 0, %s82
      %s86 = sphi 0, %s85
      %s102 = sphi 0, %s86
      %s108 = sphi 0, %s110
      %s111 = sphi 0, %s108
      %s112 = sphi 0, %s111
      %s128 = sphi 0, %s112
      %s132 = sphi 0, %s132
      %s134 = sphi 0, %s132
      %s135 = sphi 0, %s134
      %s149 = sphi 0, %s135
      %s153 = sphi 0, %s153
      %s155 = sphi 0, %s153
      %s156 = sphi 0, %s155
      %s170 = sphi 0, %s156
      %s174 = sphi 0, %s174
      %s176 = sphi 0, %s174
      %s177 = sphi 0, %s176
      %s191 = sphi 0, %s177
      %s195 = sphi 0, %s195
      %s197 = sphi 0, %s195
      %s198 = sphi 0, %s197
      %s212 = sphi 0, %s198
      %s216 = sphi 0, %s216
      %s218 = sphi 0, %s216
      %s219 = sphi 0, %s218
      %s233 = sphi 0, %s219
      %s239 = sphi 0, %s241
      %s242 = sphi 0, %s239
      %s243 = sphi 0, %s242
      %s259 = sphi 0, %s243
    $region4: #{tpu_custom_call.1} parent=1 // loop_header_branch
      %28 = sbr.rel (%p26) target = $region8
    $region5: #{tpu_custom_call.1} parent=1 // loop_body
      %s30 = ssub.s32 %s25, 1
      %s31 = ssub.s32 %s25, 2
      %s32 = sadd.s32 %s25, 1
      %s34 = sadd.s32 %s33, 1
      %p37 = scmp.eq.s32.totalorder %s25, 1
      %p38 = scmp.ne.s32.totalorder %s33, %s35
      %p39 = scmp.eq.s32.totalorder %s25, 0
      %p40 = por %p38, %p39
      %p41 = scmp.ne.s32.totalorder %s33, %s35
      %p42 = scmp.eq.s32.totalorder %s30, 1
      %p43 = por %p41, %p42
      %p44 = scmp.ne.s32.totalorder %s35, %s36
      %p45 = scmp.eq.s32.totalorder %s30, 0
      %p46 = por %p44, %p45
      %p47 = scmp.ne.s32.totalorder %s35, %s36
      %p48 = scmp.eq.s32.totalorder %s31, 1
      %p49 = por %p47, %p48
      %p51 = scmp.ne.s32.totalorder %s36, %s50
      %p52 = scmp.eq.s32.totalorder %s31, 0
      %p53 = por %p51, %p52
      %s54 = ssub.s32 %s25, %s32
      %p55 = scmp.eq.s32.totalorder %s54, 0
      %s57 = sadd.s32 %s56, 1
      %s58 = scalar_select %p55, %s56, %s57
      %p61 = pneg %p55
      %p62 = scmp.eq.s32.totalorder %s25, 1
      %p63 = por %p61, %p62
      %p64 = scmp.ne.s32.totalorder %s56, %s59
      %p65 = scmp.eq.s32.totalorder %s25, 0
      %p66 = por %p64, %p65
      %p67 = scmp.ne.s32.totalorder %s56, %s59
      %p68 = scmp.eq.s32.totalorder %s30, 1
      %p69 = por %p67, %p68
      %p70 = scmp.ne.s32.totalorder %s59, %s60
      %p71 = scmp.eq.s32.totalorder %s30, 0
      %p72 = por %p70, %p71
      %p73 = scmp.ne.s32.totalorder %s59, %s60
      %p74 = scmp.eq.s32.totalorder %s31, 1
      %p75 = por %p73, %p74
      %p77 = scmp.ne.s32.totalorder %s60, %s76
      %p78 = scmp.eq.s32.totalorder %s31, 0
      %p79 = por %p77, %p78
      %s80 = ssub.s32 %s25, %s32
      %p81 = scmp.eq.s32.totalorder %s80, 0
      %s83 = sadd.s32 %s82, 1
      %s84 = scalar_select %p81, %s82, %s83
      %p87 = pneg %p81
      %p88 = scmp.eq.s32.totalorder %s25, 1
      %p89 = por %p87, %p88
      %p90 = scmp.ne.s32.totalorder %s82, %s85
      %p91 = scmp.eq.s32.totalorder %s25, 0
      %p92 = por %p90, %p91
      %p93 = scmp.ne.s32.totalorder %s82, %s85
      %p94 = scmp.eq.s32.totalorder %s30, 1
      %p95 = por %p93, %p94
      %p96 = scmp.ne.s32.totalorder %s85, %s86
      %p97 = scmp.eq.s32.totalorder %s30, 0
      %p98 = por %p96, %p97
      %p99 = scmp.ne.s32.totalorder %s85, %s86
      %p100 = scmp.eq.s32.totalorder %s31, 1
      %p101 = por %p99, %p100
      %p103 = scmp.ne.s32.totalorder %s86, %s102
      %p104 = scmp.eq.s32.totalorder %s31, 0
      %p105 = por %p103, %p104
      %s106 = ssub.s32 %s25, %s32
      %p107 = scmp.eq.s32.totalorder %s106, 0
      %s109 = sadd.s32 %s108, 1
      %s110 = scalar_select %p107, %s108, %s109
      %p113 = pneg %p107
      %p114 = scmp.eq.s32.totalorder %s25, 1
      %p115 = por %p113, %p114
      %p116 = scmp.ne.s32.totalorder %s108, %s111
      %p117 = scmp.eq.s32.totalorder %s25, 0
      %p118 = por %p116, %p117
      %p119 = scmp.ne.s32.totalorder %s108, %s111
      %p120 = scmp.eq.s32.totalorder %s30, 1
      %p121 = por %p119, %p120
      %p122 = scmp.ne.s32.totalorder %s111, %s112
      %p123 = scmp.eq.s32.totalorder %s30, 0
      %p124 = por %p122, %p123
      %p125 = scmp.ne.s32.totalorder %s111, %s112
      %p126 = scmp.eq.s32.totalorder %s31, 1
      %p127 = por %p125, %p126
      %p129 = scmp.ne.s32.totalorder %s112, %s128
      %p130 = scmp.eq.s32.totalorder %s31, 0
      %p131 = por %p129, %p130
      %s133 = sadd.s32 %s132, 1
      %p136 = scmp.eq.s32.totalorder %s25, 1
      %p137 = scmp.ne.s32.totalorder %s132, %s134
      %p138 = scmp.eq.s32.totalorder %s25, 0
      %p139 = por %p137, %p138
      %p140 = scmp.ne.s32.totalorder %s132, %s134
      %p141 = scmp.eq.s32.totalorder %s30, 1
      %p142 = por %p140, %p141
      %p143 = scmp.ne.s32.totalorder %s134, %s135
      %p144 = scmp.eq.s32.totalorder %s30, 0
      %p145 = por %p143, %p144
      %p146 = scmp.ne.s32.totalorder %s134, %s135
      %p147 = scmp.eq.s32.totalorder %s31, 1
      %p148 = por %p146, %p147
      %p150 = scmp.ne.s32.totalorder %s135, %s149
      %p151 = scmp.eq.s32.totalorder %s31, 0
      %p152 = por %p150, %p151
      %s154 = sadd.s32 %s153, 1
      %p157 = scmp.eq.s32.totalorder %s25, 1
      %p158 = scmp.ne.s32.totalorder %s153, %s155
      %p159 = scmp.eq.s32.totalorder %s25, 0
      %p160 = por %p158, %p159
      %p161 = scmp.ne.s32.totalorder %s153, %s155
      %p162 = scmp.eq.s32.totalorder %s30, 1
      %p163 = por %p161, %p162
      %p164 = scmp.ne.s32.totalorder %s155, %s156
      %p165 = scmp.eq.s32.totalorder %s30, 0
      %p166 = por %p164, %p165
      %p167 = scmp.ne.s32.totalorder %s155, %s156
      %p168 = scmp.eq.s32.totalorder %s31, 1
      %p169 = por %p167, %p168
      %p171 = scmp.ne.s32.totalorder %s156, %s170
      %p172 = scmp.eq.s32.totalorder %s31, 0
      %p173 = por %p171, %p172
      %s175 = sadd.s32 %s174, 1
      %p178 = scmp.eq.s32.totalorder %s25, 1
      %p179 = scmp.ne.s32.totalorder %s174, %s176
      %p180 = scmp.eq.s32.totalorder %s25, 0
      %p181 = por %p179, %p180
      %p182 = scmp.ne.s32.totalorder %s174, %s176
      %p183 = scmp.eq.s32.totalorder %s30, 1
      %p184 = por %p182, %p183
      %p185 = scmp.ne.s32.totalorder %s176, %s177
      %p186 = scmp.eq.s32.totalorder %s30, 0
      %p187 = por %p185, %p186
      %p188 = scmp.ne.s32.totalorder %s176, %s177
      %p189 = scmp.eq.s32.totalorder %s31, 1
      %p190 = por %p188, %p189
      %p192 = scmp.ne.s32.totalorder %s177, %s191
      %p193 = scmp.eq.s32.totalorder %s31, 0
      %p194 = por %p192, %p193
      %s196 = sadd.s32 %s195, 1
      %p199 = scmp.eq.s32.totalorder %s25, 1
      %p200 = scmp.ne.s32.totalorder %s195, %s197
      %p201 = scmp.eq.s32.totalorder %s25, 0
      %p202 = por %p200, %p201
      %p203 = scmp.ne.s32.totalorder %s195, %s197
      %p204 = scmp.eq.s32.totalorder %s30, 1
      %p205 = por %p203, %p204
      %p206 = scmp.ne.s32.totalorder %s197, %s198
      %p207 = scmp.eq.s32.totalorder %s30, 0
      %p208 = por %p206, %p207
      %p209 = scmp.ne.s32.totalorder %s197, %s198
      %p210 = scmp.eq.s32.totalorder %s31, 1
      %p211 = por %p209, %p210
      %p213 = scmp.ne.s32.totalorder %s198, %s212
      %p214 = scmp.eq.s32.totalorder %s31, 0
      %p215 = por %p213, %p214
      %s217 = sadd.s32 %s216, 1
      %p220 = scmp.eq.s32.totalorder %s25, 1
      %p221 = scmp.ne.s32.totalorder %s216, %s218
      %p222 = scmp.eq.s32.totalorder %s25, 0
      %p223 = por %p221, %p222
      %p224 = scmp.ne.s32.totalorder %s216, %s218
      %p225 = scmp.eq.s32.totalorder %s30, 1
      %p226 = por %p224, %p225
      %p227 = scmp.ne.s32.totalorder %s218, %s219
      %p228 = scmp.eq.s32.totalorder %s30, 0
      %p229 = por %p227, %p228
      %p230 = scmp.ne.s32.totalorder %s218, %s219
      %p231 = scmp.eq.s32.totalorder %s31, 1
      %p232 = por %p230, %p231
      %p234 = scmp.ne.s32.totalorder %s219, %s233
      %p235 = scmp.eq.s32.totalorder %s31, 0
      %p236 = por %p234, %p235
      %s237 = ssub.s32 %s25, %s32
      %p238 = scmp.eq.s32.totalorder %s237, 0
      %s240 = sadd.s32 %s239, 1
      %s241 = scalar_select %p238, %s239, %s240
      %p244 = pneg %p238
      %p245 = scmp.eq.s32.totalorder %s25, 1
      %p246 = por %p244, %p245
      %p247 = scmp.ne.s32.totalorder %s239, %s242
      %p248 = scmp.eq.s32.totalorder %s25, 0
      %p249 = por %p247, %p248
      %p250 = scmp.ne.s32.totalorder %s239, %s242
      %p251 = scmp.eq.s32.totalorder %s30, 1
      %p252 = por %p250, %p251
      %p253 = scmp.ne.s32.totalorder %s242, %s243
      %p254 = scmp.eq.s32.totalorder %s30, 0
      %p255 = por %p253, %p254
      %p256 = scmp.ne.s32.totalorder %s242, %s243
      %p257 = scmp.eq.s32.totalorder %s31, 1
      %p258 = por %p256, %p257
      %p260 = scmp.ne.s32.totalorder %s243, %s259
      %p261 = scmp.eq.s32.totalorder %s31, 0
      %p262 = por %p260, %p261
      %p263 = scmp.le.s32.totalorder 1, %s25
      %p264 = scmp.lt.s32.totalorder %s25, 3
      %p265 = pnand %p263, %p264
      %p266 = pneg %p265
      // Predicated region
      $region9: #{tpu_custom_call.1} parent=5 // pred_check
        _
      $region10: #{tpu_custom_call.1} parent=5 // pred_check_branch
        %268 = sbr.rel (%p265) target = $region12
      $region11: #{tpu_custom_call.1} parent=5 // pred_region
        %s269 = ssub.s32 %s25, 1
        // Predicated region
        $region13: #{tpu_custom_call.1} parent=11 // pred_check
          %p270 = pneg %p46
        $region14: #{tpu_custom_call.1} parent=11 // pred_check_branch
          %272 = sbr.rel (%p270) target = $region16
        $region15: #{tpu_custom_call.1} parent=11 // pred_region
          %s274 = ssub.s32 16, 16
          %275 = vsyncadd [#allocation5], %s274
          %278 = dma.hbm_to_smem %s0, 16, [#allocation2], [#allocation5]
        $region16: #{tpu_custom_call.1} parent=11 // pred_fallthru
          _
        // Predicated region
        $region17: #{tpu_custom_call.1} parent=11 // pred_check
          %p279 = pneg %p145
        $region18: #{tpu_custom_call.1} parent=11 // pred_check_branch
          %281 = sbr.rel (%p279) target = $region20
        $region19: #{tpu_custom_call.1} parent=11 // pred_region
          _
        $region20: #{tpu_custom_call.1} parent=11 // pred_fallthru
          _
        // Predicated region
        $region21: #{tpu_custom_call.1} parent=11 // pred_check
          %p282 = pneg %p166
        $region22: #{tpu_custom_call.1} parent=11 // pred_check_branch
          %284 = sbr.rel (%p282) target = $region24
        $region23: #{tpu_custom_call.1} parent=11 // pred_region
          _
        $region24: #{tpu_custom_call.1} parent=11 // pred_fallthru
          _
        // Predicated region
        $region25: #{tpu_custom_call.1} parent=11 // pred_check
          %p285 = pneg %p187
        $region26: #{tpu_custom_call.1} parent=11 // pred_check_branch
          %287 = sbr.rel (%p285) target = $region28
        $region27: #{tpu_custom_call.1} parent=11 // pred_region
          _
        $region28: #{tpu_custom_call.1} parent=11 // pred_fallthru
          _
        // Predicated region
        $region29: #{tpu_custom_call.1} parent=11 // pred_check
          %p288 = pneg %p208
        $region30: #{tpu_custom_call.1} parent=11 // pred_check_branch
          %290 = sbr.rel (%p288) target = $region32
        $region31: #{tpu_custom_call.1} parent=11 // pred_region
          _
        $region32: #{tpu_custom_call.1} parent=11 // pred_fallthru
          _
        // Predicated region
        $region33: #{tpu_custom_call.1} parent=11 // pred_check
          %p291 = pneg %p229
        $region34: #{tpu_custom_call.1} parent=11 // pred_check_branch
          %293 = sbr.rel (%p291) target = $region36
        $region35: #{tpu_custom_call.1} parent=11 // pred_region
          _
        $region36: #{tpu_custom_call.1} parent=11 // pred_fallthru
          _
      $region12: #{tpu_custom_call.1} parent=5 // pred_fallthru
        _
      %p294 = scmp.lt.s32.totalorder %s25, 2
      // Predicated region
      $region37: #{tpu_custom_call.1} parent=5 // pred_check
        %p295 = pneg %p294
      $region38: #{tpu_custom_call.1} parent=5 // pred_check_branch
        %297 = sbr.rel (%p295) target = $region40
      $region39: #{tpu_custom_call.1} parent=5 // pred_region
        // Predicated region
        $region41: #{tpu_custom_call.1} parent=39 // pred_check
          %p298 = pneg %p66
        $region42: #{tpu_custom_call.1} parent=39 // pred_check_branch
          %300 = sbr.rel (%p298) target = $region44
        $region43: #{tpu_custom_call.1} parent=39 // pred_region
          %s301 = sand.u32 %s56, 1
          %s302 = scalar_lea.sflag [#allocation3], %s301
          %s303 = sand.u32 %s56, 1
          %s304 = smul.addr %s303, 16
          %s305 = scalar_lea.vmem [#allocation6], %s304
          %s307 = ssub.s32 256, 256
          %308 = vsyncadd %s302, %s307
          %s309 = smul.addr %s25, 2
          %s310 = smul.addr %s309, 128
          %s311 = scalar_lea.hbm %s1, %s310
          %s312 = sshll.u32 %s305, 4
          %s313 = int_to_ptr.vmem [resolvable:$true] %s312
          %318 = dma.hbm_to_vmem [thread:$0]  %s311, 256, %s313, %s302, 128, 128, 8
        $region44: #{tpu_custom_call.1} parent=39 // pred_fallthru
          _
        // Predicated region
        $region45: #{tpu_custom_call.1} parent=39 // pred_check
          %p319 = pneg %p92
        $region46: #{tpu_custom_call.1} parent=39 // pred_check_branch
          %321 = sbr.rel (%p319) target = $region48
        $region47: #{tpu_custom_call.1} parent=39 // pred_region
          %s322 = sand.u32 %s25, 1
          %s323 = scalar_lea.sflag [#allocation8], %s322
          %s324 = sand.u32 %s82, 1
          %s325 = smul.addr %s324, 16
          %s326 = scalar_lea.vmem [#allocation7], %s325
          %s328 = ssub.s32 256, 256
          %329 = vsyncadd %s323, %s328
          %s330 = smul.addr %s25, 2
          %s331 = smul.addr %s330, 128
          %s332 = scalar_lea.hbm %s2, %s331
          %s333 = sshll.u32 %s326, 4
          %s334 = int_to_ptr.vmem [resolvable:$true] %s333
          %339 = dma.hbm_to_vmem [thread:$0]  %s332, 256, %s334, %s323, 128, 128, 8
        $region48: #{tpu_custom_call.1} parent=39 // pred_fallthru
          _
        // Predicated region
        $region49: #{tpu_custom_call.1} parent=39 // pred_check
          %p340 = pneg %p118
        $region50: #{tpu_custom_call.1} parent=39 // pred_check_branch
          %342 = sbr.rel (%p340) target = $region52
        $region51: #{tpu_custom_call.1} parent=39 // pred_region
          %s343 = sand.u32 %s25, 1
          %s344 = scalar_lea.sflag [#allocation8], %s343
          %s345 = sand.u32 %s108, 1
          %s346 = smul.addr %s345, 16
          %s347 = scalar_lea.vmem [#allocation9], %s346
          %s349 = ssub.s32 256, 256
          %350 = vsyncadd %s344, %s349
          %s351 = smul.addr %s25, 2
          %s352 = smul.addr %s351, 128
          %s353 = scalar_lea.hbm %s3, %s352
          %s354 = sshll.u32 %s347, 4
          %s355 = int_to_ptr.vmem [resolvable:$true] %s354
          %360 = dma.hbm_to_vmem [thread:$0]  %s353, 256, %s355, %s344, 128, 128, 8
        $region52: #{tpu_custom_call.1} parent=39 // pred_fallthru
          _
      $region40: #{tpu_custom_call.1} parent=5 // pred_fallthru
        _
      %p361 = scmp.le.s32.totalorder 1, %s25
      %p362 = scmp.lt.s32.totalorder %s25, 3
      %p363 = pnand %p361, %p362
      %p364 = pneg %p363
      // Predicated region
      $region53: #{tpu_custom_call.1} parent=5 // pred_check
        _
      $region54: #{tpu_custom_call.1} parent=5 // pred_check_branch
        %366 = sbr.rel (%p363) target = $region56
      $region55: #{tpu_custom_call.1} parent=5 // pred_region
        %s367 = ssub.s32 %s25, 1
        // Predicated region
        $region57: #{tpu_custom_call.1} parent=55 // pred_check
          %p368 = pneg %p46
        $region58: #{tpu_custom_call.1} parent=55 // pred_check_branch
          %370 = sbr.rel (%p368) target = $region60
        $region59: #{tpu_custom_call.1} parent=55 // pred_region
          %371 = dma.done [#allocation5], 16
        $region60: #{tpu_custom_call.1} parent=55 // pred_fallthru
          _
        %s372 = sand.u32 %s59, 1
        %s373 = scalar_lea.sflag [#allocation3], %s372
        %s374 = sand.u32 %s59, 1
        %s375 = smul.addr %s374, 16
        %s376 = scalar_lea.vmem [#allocation6], %s375
        // Predicated region
        $region61: #{tpu_custom_call.1} parent=55 // pred_check
          %p377 = pneg %p72
        $region62: #{tpu_custom_call.1} parent=55 // pred_check_branch
          %379 = sbr.rel (%p377) target = $region64
        $region63: #{tpu_custom_call.1} parent=55 // pred_region
          %380 = dma.done %s373, 256
        $region64: #{tpu_custom_call.1} parent=55 // pred_fallthru
          _
        %s381 = sand.u32 %s30, 1
        %s382 = scalar_lea.sflag [#allocation8], %s381
        %s383 = sand.u32 %s85, 1
        %s384 = smul.addr %s383, 16
        %s385 = scalar_lea.vmem [#allocation7], %s384
        // Predicated region
        $region65: #{tpu_custom_call.1} parent=55 // pred_check
          %p386 = pneg %p98
        $region66: #{tpu_custom_call.1} parent=55 // pred_check_branch
          %388 = sbr.rel (%p386) target = $region68
        $region67: #{tpu_custom_call.1} parent=55 // pred_region
          %389 = dma.done %s382, 256
        $region68: #{tpu_custom_call.1} parent=55 // pred_fallthru
          _
        %s390 = sand.u32 %s30, 1
        %s391 = scalar_lea.sflag [#allocation8], %s390
        %s392 = sand.u32 %s111, 1
        %s393 = smul.addr %s392, 16
        %s394 = scalar_lea.vmem [#allocation9], %s393
        // Predicated region
        $region69: #{tpu_custom_call.1} parent=55 // pred_check
          %p395 = pneg %p124
        $region70: #{tpu_custom_call.1} parent=55 // pred_check_branch
          %397 = sbr.rel (%p395) target = $region72
        $region71: #{tpu_custom_call.1} parent=55 // pred_region
          %398 = dma.done %s391, 256
        $region72: #{tpu_custom_call.1} parent=55 // pred_fallthru
          _
        %399 = sfence
        %p400 = pneg %p46
        %p401 = pneg %p43
        %s402 = sand.u32 %s59, 1
        %s403 = scalar_lea.sflag [#allocation3], %s402
        %s404 = sand.u32 %s59, 1
        %s405 = smul.addr %s404, 16
        %s406 = scalar_lea.vmem [#allocation6], %s405
        %p407 = pneg %p72
        %p408 = pneg %p69
        %s409 = sand.u32 %s30, 1
        %s410 = scalar_lea.sflag [#allocation8], %s409
        %s411 = sand.u32 %s85, 1
        %s412 = smul.addr %s411, 16
        %s413 = scalar_lea.vmem [#allocation7], %s412
        %p414 = pneg %p98
        %p415 = pneg %p95
        %s416 = sand.u32 %s30, 1
        %s417 = scalar_lea.sflag [#allocation8], %s416
        %s418 = sand.u32 %s111, 1
        %s419 = smul.addr %s418, 16
        %s420 = scalar_lea.vmem [#allocation9], %s419
        %p421 = pneg %p124
        %p422 = pneg %p121
        %p423 = pneg %p145
        %p424 = pneg %p142
        %p425 = pneg %p166
        %p426 = pneg %p163
        %p427 = pneg %p187
        %p428 = pneg %p184
        %p429 = pneg %p208
        %p430 = pneg %p205
        %p431 = pneg %p229
        %p432 = pneg %p226
        %p433 = pneg %p255
        %p434 = pneg %p252
        %s435 = sand.u32 %s242, 1
        %s436 = scalar_lea.sflag [#allocation4], %s435
        %s437 = sand.u32 %s242, 1
        %s438 = smul.addr %s437, 16
        %s439 = scalar_lea.vmem [#allocation10], %s438
        %v440 = vld [vmem:[%s376] sm:$0xff]
        %v441 = vld [vmem:[%s376 + $0x8] sm:$0xff]
        %v442 = vld [vmem:[%s4] sm:$0xff]
        %v443 = vld [vmem:[%s4 + $0x8] sm:$0xff]
        %v444 = vld [vmem:[%s4 + $0x10] sm:$0xff]
        %v445 = vld [vmem:[%s4 + $0x18] sm:$0xff]
        %v446 = vld [vmem:[%s4 + $0x20] sm:$0xff]
        %v447 = vld [vmem:[%s4 + $0x28] sm:$0xff]
        %v448 = vld [vmem:[%s4 + $0x30] sm:$0xff]
        %v449 = vld [vmem:[%s4 + $0x38] sm:$0xff]
        %vm450 = vcmask 523264
        %v452 = vsel %vm450, %v440, 0
        %v455 = vsel %vm450, %v441, 0
        %457 = vmatprep.subr.mxu0 0.0
        %458 = vmatpush1.msra.mxu0 %v442
        %459 = vmatprep.subr.mxu0 0.0
        %460 = vmatpush1.msra.mxu0 %v443
        %461 = vmatprep.subr.mxu0 0.0
        %462 = vmatpush1.msra.mxu0 %v444
        %463 = vmatprep.subr.mxu0 0.0
        %464 = vmatpush1.msra.mxu0 %v445
        %465 = vmatprep.subr.mxu0 0.0
        %466 = vmatpush1.msra.mxu0 %v446
        %467 = vmatprep.subr.mxu0 0.0
        %468 = vmatpush1.msra.mxu0 %v447
        %469 = vmatprep.subr.mxu0 0.0
        %470 = vmatpush1.msra.mxu0 %v448
        %471 = vmatprep.subr.mxu0 0.0
        %472 = vmatpush1.msra.mxu0 %v449
        %473 = vmatprep.subr.mxu0 0.0
        %474 = vmatpush1.msra.mxu0 0.0
        %475 = vmatprep.subr.mxu0 0.0
        %476 = vmatpush1.msra.mxu0 0.0
        %477 = vmatprep.subr.mxu0 0.0
        %478 = vmatpush1.msra.mxu0 0.0
        %479 = vmatprep.subr.mxu0 0.0
        %480 = vmatpush1.msra.mxu0 0.0
        %481 = vmatprep.subr.mxu0 0.0
        %482 = vmatpush1.msra.mxu0 0.0
        %483 = vmatprep.subr.mxu0 0.0
        %484 = vmatpush1.msra.mxu0 0.0
        %485 = vmatprep.subr.mxu0 0.0
        %486 = vmatpush1.msra.mxu0 0.0
        %487 = vmatprep.subr.mxu0 0.0
        %488 = vmatpush1.msra.mxu0 0.0
        %489 = vmatprep.subr.mxu0 0.0
        %490 = vmatpush1.msra.mxu0 0.0
        %491 = vmatprep.subr.mxu0 0.0
        %492 = vmatpush1.msra.mxu0 0.0
        %493 = vmatprep.subr.mxu0 0.0
        %494 = vmatpush1.msra.mxu0 0.0
        %495 = vmatprep.subr.mxu0 0.0
        %496 = vmatpush1.msra.mxu0 0.0
        %497 = vmatprep.subr.mxu0 0.0
        %498 = vmatpush1.msra.mxu0 0.0
        %499 = vmatprep.subr.mxu0 0.0
        %500 = vmatpush1.msra.mxu0 0.0
        %501 = vmatprep.subr.mxu0 0.0
        %502 = vmatpush1.msra.mxu0 0.0
        %503 = vmatprep.subr.mxu0 0.0
        %504 = vmatpush1.msra.mxu0 0.0
        %505 = vmatprep.subr.mxu0 0.0
        %506 = vmatpush1.msra.mxu0 0.0
        %507 = vmatprep.subr.mxu0 0.0
        %508 = vmatpush1.msra.mxu0 0.0
        %509 = vmatprep.subr.mxu0 0.0
        %510 = vmatpush1.msra.mxu0 0.0
        %511 = vmatprep.subr.mxu0 0.0
        %512 = vmatpush1.msra.mxu0 0.0
        %513 = vmatprep.subr.mxu0 0.0
        %514 = vmatpush1.msra.mxu0 0.0
        %515 = vmatprep.subr.mxu0 0.0
        %516 = vmatpush1.msra.mxu0 0.0
        %517 = vmatprep.subr.mxu0 0.0
        %518 = vmatpush1.msra.mxu0 0.0
        %519 = vmatprep.subr.mxu0 0.0
        %520 = vmatpush1.msra.mxu0 0.0
        %521 = vmatprep.mubr.f32.mxu0 0.0
        %522 = vmatmul.mubr.f32.gmra.mrb[0].mxu0 %v452
        %v523 = vpop.f32.mrb[0].mxu0
        %v524 = vadd.f32 0.0, %v523
        %v525 = vpop.f32.mrb[0].mxu0
        %526 = vmatprep.mubr.f32.mxu0 0.0
        %527 = vmatmul.mubr.f32.gmra.mrb[0].mxu0 %v455
        %v528 = vpop.f32.mrb[0].mxu0
        %v529 = vadd.f32 0.0, %v528
        %v530 = vpop.f32.mrb[0].mxu0
        %531 = vdwg.mxu0
        %v532 = vld [vmem:[%s385] sm:$0xff]
        %v533 = vld [vmem:[%s385 + $0x8] sm:$0xff]
        %v534 = vld [vmem:[%s5] sm:$0xff]
        %v535 = vld [vmem:[%s5 + $0x8] sm:$0xff]
        %v536 = vld [vmem:[%s5 + $0x10] sm:$0xff]
        %v537 = vld [vmem:[%s5 + $0x18] sm:$0xff]
        %v538 = vld [vmem:[%s5 + $0x20] sm:$0xff]
        %v539 = vld [vmem:[%s5 + $0x28] sm:$0xff]
        %v540 = vld [vmem:[%s5 + $0x30] sm:$0xff]
        %v541 = vld [vmem:[%s5 + $0x38] sm:$0xff]
        %v543 = vsel %vm450, %v532, 0
        %v546 = vsel %vm450, %v533, 0
        %548 = vmatprep.subr.mxu0 0.0
        %549 = vmatpush1.msra.mxu0 %v534
        %550 = vmatprep.subr.mxu0 0.0
        %551 = vmatpush1.msra.mxu0 %v535
        %552 = vmatprep.subr.mxu0 0.0
        %553 = vmatpush1.msra.mxu0 %v536
        %554 = vmatprep.subr.mxu0 0.0
        %555 = vmatpush1.msra.mxu0 %v537
        %556 = vmatprep.subr.mxu0 0.0
        %557 = vmatpush1.msra.mxu0 %v538
        %558 = vmatprep.subr.mxu0 0.0
        %559 = vmatpush1.msra.mxu0 %v539
        %560 = vmatprep.subr.mxu0 0.0
        %561 = vmatpush1.msra.mxu0 %v540
        %562 = vmatprep.subr.mxu0 0.0
        %563 = vmatpush1.msra.mxu0 %v541
        %564 = vmatprep.subr.mxu0 0.0
        %565 = vmatpush1.msra.mxu0 0.0
        %566 = vmatprep.subr.mxu0 0.0
        %567 = vmatpush1.msra.mxu0 0.0
        %568 = vmatprep.subr.mxu0 0.0
        %569 = vmatpush1.msra.mxu0 0.0
        %570 = vmatprep.subr.mxu0 0.0
        %571 = vmatpush1.msra.mxu0 0.0
        %572 = vmatprep.subr.mxu0 0.0
        %573 = vmatpush1.msra.mxu0 0.0
        %574 = vmatprep.subr.mxu0 0.0
        %575 = vmatpush1.msra.mxu0 0.0
        %576 = vmatprep.subr.mxu0 0.0
        %577 = vmatpush1.msra.mxu0 0.0
        %578 = vmatprep.subr.mxu0 0.0
        %579 = vmatpush1.msra.mxu0 0.0
        %580 = vmatprep.subr.mxu0 0.0
        %581 = vmatpush1.msra.mxu0 0.0
        %582 = vmatprep.subr.mxu0 0.0
        %583 = vmatpush1.msra.mxu0 0.0
        %584 = vmatprep.subr.mxu0 0.0
        %585 = vmatpush1.msra.mxu0 0.0
        %586 = vmatprep.subr.mxu0 0.0
        %587 = vmatpush1.msra.mxu0 0.0
        %588 = vmatprep.subr.mxu0 0.0
        %589 = vmatpush1.msra.mxu0 0.0
        %590 = vmatprep.subr.mxu0 0.0
        %591 = vmatpush1.msra.mxu0 0.0
        %592 = vmatprep.subr.mxu0 0.0
        %593 = vmatpush1.msra.mxu0 0.0
        %594 = vmatprep.subr.mxu0 0.0
        %595 = vmatpush1.msra.mxu0 0.0
        %596 = vmatprep.subr.mxu0 0.0
        %597 = vmatpush1.msra.mxu0 0.0
        %598 = vmatprep.subr.mxu0 0.0
        %599 = vmatpush1.msra.mxu0 0.0
        %600 = vmatprep.subr.mxu0 0.0
        %601 = vmatpush1.msra.mxu0 0.0
        %602 = vmatprep.subr.mxu0 0.0
        %603 = vmatpush1.msra.mxu0 0.0
        %604 = vmatprep.subr.mxu0 0.0
        %605 = vmatpush1.msra.mxu0 0.0
        %606 = vmatprep.subr.mxu0 0.0
        %607 = vmatpush1.msra.mxu0 0.0
        %608 = vmatprep.subr.mxu0 0.0
        %609 = vmatpush1.msra.mxu0 0.0
        %610 = vmatprep.subr.mxu0 0.0
        %611 = vmatpush1.msra.mxu0 0.0
        %612 = vmatprep.mubr.f32.mxu0 0.0
        %613 = vmatmul.mubr.f32.gmra.mrb[0].mxu0 %v543
        %v614 = vpop.f32.mrb[0].mxu0
        %v615 = vadd.f32 0.0, %v614
        %v616 = vpop.f32.mrb[0].mxu0
        %617 = vmatprep.mubr.f32.mxu0 0.0
        %618 = vmatmul.mubr.f32.gmra.mrb[0].mxu0 %v546
        %v619 = vpop.f32.mrb[0].mxu0
        %v620 = vadd.f32 0.0, %v619
        %v621 = vpop.f32.mrb[0].mxu0
        %622 = vdwg.mxu0
        %v623 = vld [vmem:[%s394] sm:$0xff]
        %v624 = vld [vmem:[%s394 + $0x8] sm:$0xff]
        %v625 = vld [vmem:[%s6] sm:$0xff]
        %v626 = vld [vmem:[%s6 + $0x8] sm:$0xff]
        %v627 = vld [vmem:[%s6 + $0x10] sm:$0xff]
        %v628 = vld [vmem:[%s6 + $0x18] sm:$0xff]
        %v629 = vld [vmem:[%s6 + $0x20] sm:$0xff]
        %v630 = vld [vmem:[%s6 + $0x28] sm:$0xff]
        %v631 = vld [vmem:[%s6 + $0x30] sm:$0xff]
        %v632 = vld [vmem:[%s6 + $0x38] sm:$0xff]
        %v634 = vsel %vm450, %v623, 0
        %v637 = vsel %vm450, %v624, 0
        %639 = vmatprep.subr.mxu0 0.0
        %640 = vmatpush1.msra.mxu0 %v625
        %641 = vmatprep.subr.mxu0 0.0
        %642 = vmatpush1.msra.mxu0 %v626
        %643 = vmatprep.subr.mxu0 0.0
        %644 = vmatpush1.msra.mxu0 %v627
        %645 = vmatprep.subr.mxu0 0.0
        %646 = vmatpush1.msra.mxu0 %v628
        %647 = vmatprep.subr.mxu0 0.0
        %648 = vmatpush1.msra.mxu0 %v629
        %649 = vmatprep.subr.mxu0 0.0
        %650 = vmatpush1.msra.mxu0 %v630
        %651 = vmatprep.subr.mxu0 0.0
        %652 = vmatpush1.msra.mxu0 %v631
        %653 = vmatprep.subr.mxu0 0.0
        %654 = vmatpush1.msra.mxu0 %v632
        %655 = vmatprep.subr.mxu0 0.0
        %656 = vmatpush1.msra.mxu0 0.0
        %657 = vmatprep.subr.mxu0 0.0
        %658 = vmatpush1.msra.mxu0 0.0
        %659 = vmatprep.subr.mxu0 0.0
        %660 = vmatpush1.msra.mxu0 0.0
        %661 = vmatprep.subr.mxu0 0.0
        %662 = vmatpush1.msra.mxu0 0.0
        %663 = vmatprep.subr.mxu0 0.0
        %664 = vmatpush1.msra.mxu0 0.0
        %665 = vmatprep.subr.mxu0 0.0
        %666 = vmatpush1.msra.mxu0 0.0
        %667 = vmatprep.subr.mxu0 0.0
        %668 = vmatpush1.msra.mxu0 0.0
        %669 = vmatprep.subr.mxu0 0.0
        %670 = vmatpush1.msra.mxu0 0.0
        %671 = vmatprep.subr.mxu0 0.0
        %672 = vmatpush1.msra.mxu0 0.0
        %673 = vmatprep.subr.mxu0 0.0
        %674 = vmatpush1.msra.mxu0 0.0
        %675 = vmatprep.subr.mxu0 0.0
        %676 = vmatpush1.msra.mxu0 0.0
        %677 = vmatprep.subr.mxu0 0.0
        %678 = vmatpush1.msra.mxu0 0.0
        %679 = vmatprep.subr.mxu0 0.0
        %680 = vmatpush1.msra.mxu0 0.0
        %681 = vmatprep.subr.mxu0 0.0
        %682 = vmatpush1.msra.mxu0 0.0
        %683 = vmatprep.subr.mxu0 0.0
        %684 = vmatpush1.msra.mxu0 0.0
        %685 = vmatprep.subr.mxu0 0.0
        %686 = vmatpush1.msra.mxu0 0.0
        %687 = vmatprep.subr.mxu0 0.0
        %688 = vmatpush1.msra.mxu0 0.0
        %689 = vmatprep.subr.mxu0 0.0
        %690 = vmatpush1.msra.mxu0 0.0
        %691 = vmatprep.subr.mxu0 0.0
        %692 = vmatpush1.msra.mxu0 0.0
        %693 = vmatprep.subr.mxu0 0.0
        %694 = vmatpush1.msra.mxu0 0.0
        %695 = vmatprep.subr.mxu0 0.0
        %696 = vmatpush1.msra.mxu0 0.0
        %697 = vmatprep.subr.mxu0 0.0
        %698 = vmatpush1.msra.mxu0 0.0
        %699 = vmatprep.subr.mxu0 0.0
        %700 = vmatpush1.msra.mxu0 0.0
        %701 = vmatprep.subr.mxu0 0.0
        %702 = vmatpush1.msra.mxu0 0.0
        %703 = vmatprep.mubr.f32.mxu0 0.0
        %704 = vmatmul.mubr.f32.gmra.mrb[0].mxu0 %v634
        %v705 = vpop.f32.mrb[0].mxu0
        %v706 = vadd.f32 0.0, %v705
        %v707 = vpop.f32.mrb[0].mxu0
        %708 = vmatprep.mubr.f32.mxu0 0.0
        %709 = vmatmul.mubr.f32.gmra.mrb[0].mxu0 %v637
        %v710 = vpop.f32.mrb[0].mxu0
        %v711 = vadd.f32 0.0, %v710
        %v712 = vpop.f32.mrb[0].mxu0
        %713 = vdwg.mxu0
        %v714 = vmul.f32 %v524, %v524
        %v715 = vmul.f32 %v529, %v529
        %vm716 = vcmask 261120
        %v717 = vsel %vm716, %v714, 0.0
        %718 = vadd.xlane.f32.xlu0 %v717
        %v719 = vpop.xlane.xlu0 %718
        %v720 = vsel %vm716, %v715, 0.0
        %721 = vadd.xlane.f32.xlu0 %v720
        %v722 = vpop.xlane.xlu0 %721
        %v723 = vmax.f32 %v719, 1e-24
        %v724 = vmax.f32 %v722, 1e-24
        %v725 = vrsqrt.pop %v723
        %v726 = vrsqrt.pop %v724
        %v727 = vmul.f32 %v615, %v615
        %v728 = vmul.f32 %v620, %v620
        %v729 = vsel %vm716, %v727, 0.0
        %730 = vadd.xlane.f32.xlu0 %v729
        %v731 = vpop.xlane.xlu0 %730
        %v732 = vsel %vm716, %v728, 0.0
        %733 = vadd.xlane.f32.xlu0 %v732
        %v734 = vpop.xlane.xlu0 %733
        %v735 = vmax.f32 %v731, 1e-24
        %v736 = vmax.f32 %v734, 1e-24
        %v737 = vrsqrt.pop %v735
        %v738 = vrsqrt.pop %v736
        %s739 = sld [smem:[#allocation2]]
        %v740 = vstv %s739
        %v741 = vmul.f32 %v725, %v740
        %v742 = vmul.f32 %v726, %v740
        %v743 = vmul.f32 %v524, %v741
        %v744 = vmul.f32 %v529, %v742
        %v745 = vmul.f32 %v615, %v737
        %v746 = vmul.f32 %v620, %v738
        %v748 = vsel %vm716, %v743, 0
        %v751 = vsel %vm716, %v744, 0
        %v754 = vsel %vm716, %v745, 0
        %v757 = vsel %vm716, %v746, 0
        %759 = vmatprep.subr.mxu0 0.0
        %760 = vmatpush1.xpose.msra.mxu0 %v754
        %761 = vmatprep.subr.mxu0 0.0
        %762 = vmatpush1.xpose.msra.mxu0 %v757
        %763 = vmatprep.subr.mxu0 0.0
        %764 = vmatpush1.xpose.msra.mxu0 0.0
        %765 = vmatprep.subr.mxu0 0.0
        %766 = vmatpush1.xpose.msra.mxu0 0.0
        %767 = vmatprep.subr.mxu0 0.0
        %768 = vmatpush1.xpose.msra.mxu0 0.0
        %769 = vmatprep.subr.mxu0 0.0
        %770 = vmatpush1.xpose.msra.mxu0 0.0
        %771 = vmatprep.subr.mxu0 0.0
        %772 = vmatpush1.xpose.msra.mxu0 0.0
        %773 = vmatprep.subr.mxu0 0.0
        %774 = vmatpush1.xpose.msra.mxu0 0.0
        %775 = vmatprep.subr.mxu0 0.0
        %776 = vmatpush1.xpose.msra.mxu0 0.0
        %777 = vmatprep.subr.mxu0 0.0
        %778 = vmatpush1.xpose.msra.mxu0 0.0
        %779 = vmatprep.subr.mxu0 0.0
        %780 = vmatpush1.xpose.msra.mxu0 0.0
        %781 = vmatprep.subr.mxu0 0.0
        %782 = vmatpush1.xpose.msra.mxu0 0.0
        %783 = vmatprep.subr.mxu0 0.0
        %784 = vmatpush1.xpose.msra.mxu0 0.0
        %785 = vmatprep.subr.mxu0 0.0
        %786 = vmatpush1.xpose.msra.mxu0 0.0
        %787 = vmatprep.subr.mxu0 0.0
        %788 = vmatpush1.xpose.msra.mxu0 0.0
        %789 = vmatprep.subr.mxu0 0.0
        %790 = vmatpush1.xpose.msra.mxu0 0.0
        %791 = vmatprep.subr.mxu0 0.0
        %792 = vmatpush1.xpose.msra.mxu0 0.0
        %793 = vmatprep.subr.mxu0 0.0
        %794 = vmatpush1.xpose.msra.mxu0 0.0
        %795 = vmatprep.subr.mxu0 0.0
        %796 = vmatpush1.xpose.msra.mxu0 0.0
        %797 = vmatprep.subr.mxu0 0.0
        %798 = vmatpush1.xpose.msra.mxu0 0.0
        %799 = vmatprep.subr.mxu0 0.0
        %800 = vmatpush1.xpose.msra.mxu0 0.0
        %801 = vmatprep.subr.mxu0 0.0
        %802 = vmatpush1.xpose.msra.mxu0 0.0
        %803 = vmatprep.subr.mxu0 0.0
        %804 = vmatpush1.xpose.msra.mxu0 0.0
        %805 = vmatprep.subr.mxu0 0.0
        %806 = vmatpush1.xpose.msra.mxu0 0.0
        %807 = vmatprep.subr.mxu0 0.0
        %808 = vmatpush1.xpose.msra.mxu0 0.0
        %809 = vmatprep.subr.mxu0 0.0
        %810 = vmatpush1.xpose.msra.mxu0 0.0
        %811 = vmatprep.subr.mxu0 0.0
        %812 = vmatpush1.xpose.msra.mxu0 0.0
        %813 = vmatprep.subr.mxu0 0.0
        %814 = vmatpush1.xpose.msra.mxu0 0.0
        %815 = vmatprep.subr.mxu0 0.0
        %816 = vmatpush1.xpose.msra.mxu0 0.0
        %817 = vmatprep.subr.mxu0 0.0
        %818 = vmatpush1.xpose.msra.mxu0 0.0
        %819 = vmatprep.subr.mxu0 0.0
        %820 = vmatpush1.xpose.msra.mxu0 0.0
        %821 = vmatprep.subr.mxu0 0.0
        %822 = vmatpush1.xpose.msra.mxu0 0.0
        %823 = vmatprep.mubr.f32.mxu0 0.0
        %824 = vmatmul.mubr.f32.gmra.mrb[0].mxu0 %v748
        %v825 = vpop.f32.mrb[0].mxu0
        %v826 = vadd.f32 0.0, %v825
        %v827 = vpop.f32.mrb[0].mxu0
        %828 = vmatprep.mubr.f32.mxu0 0.0
        %829 = vmatmul.mubr.f32.gmra.mrb[0].mxu0 %v751
        %v830 = vpop.f32.mrb[0].mxu0
        %v831 = vadd.f32 0.0, %v830
        %v832 = vpop.f32.mrb[0].mxu0
        %833 = vdwg.mxu0
        %vm834 = vcmask 130048
        %v835 = vsel %vm834, %v826, -inf
        %836 = vmax.xlane.f32.xlu0 %v835
        %v837 = vpop.xlane.xlu0 %836
        %v838 = vsel %vm834, %v831, -inf
        %839 = vmax.xlane.f32.xlu0 %v838
        %v840 = vpop.xlane.xlu0 %839
        %v841 = vsub.f32 %v826, %v837
        %v842 = vsub.f32 %v831, %v840
        %v843 = vmul.f32 %v841, 1.442695
        %v844 = vpow.pop %v843
        %v845 = vmul.f32 %v842, 1.442695
        %v846 = vpow.pop %v845
        %v847 = vsel %vm834, %v844, 0.0
        %848 = vadd.xlane.f32.xlu0 %v847
        %v849 = vpop.xlane.xlu0 %848
        %v850 = vsel %vm834, %v846, 0.0
        %851 = vadd.xlane.f32.xlu0 %v850
        %v852 = vpop.xlane.xlu0 %851
        %v853 = vrcp.pop %v849
        %v854 = vrcp.pop %v852
        %v855 = vmul.f32 %v844, %v853
        %v856 = vmul.f32 %v846, %v854
        %v858 = vsel %vm834, %v855, 0
        %v861 = vsel %vm834, %v856, 0
        %863 = vmatprep.subr.mxu0 0.0
        %864 = vmatpush1.msra.mxu0 %v706
        %865 = vmatprep.subr.mxu0 0.0
        %866 = vmatpush1.msra.mxu0 %v711
        %867 = vmatprep.subr.mxu0 0.0
        %868 = vmatpush1.msra.mxu0 0.0
        %869 = vmatprep.subr.mxu0 0.0
        %870 = vmatpush1.msra.mxu0 0.0
        %871 = vmatprep.subr.mxu0 0.0
        %872 = vmatpush1.msra.mxu0 0.0
        %873 = vmatprep.subr.mxu0 0.0
        %874 = vmatpush1.msra.mxu0 0.0
        %875 = vmatprep.subr.mxu0 0.0
        %876 = vmatpush1.msra.mxu0 0.0
        %877 = vmatprep.subr.mxu0 0.0
        %878 = vmatpush1.msra.mxu0 0.0
        %879 = vmatprep.subr.mxu0 0.0
        %880 = vmatpush1.msra.mxu0 0.0
        %881 = vmatprep.subr.mxu0 0.0
        %882 = vmatpush1.msra.mxu0 0.0
        %883 = vmatprep.subr.mxu0 0.0
        %884 = vmatpush1.msra.mxu0 0.0
        %885 = vmatprep.subr.mxu0 0.0
        %886 = vmatpush1.msra.mxu0 0.0
        %887 = vmatprep.subr.mxu0 0.0
        %888 = vmatpush1.msra.mxu0 0.0
        %889 = vmatprep.subr.mxu0 0.0
        %890 = vmatpush1.msra.mxu0 0.0
        %891 = vmatprep.subr.mxu0 0.0
        %892 = vmatpush1.msra.mxu0 0.0
        %893 = vmatprep.subr.mxu0 0.0
        %894 = vmatpush1.msra.mxu0 0.0
        %895 = vmatprep.subr.mxu0 0.0
        %896 = vmatpush1.msra.mxu0 0.0
        %897 = vmatprep.subr.mxu0 0.0
        %898 = vmatpush1.msra.mxu0 0.0
        %899 = vmatprep.subr.mxu0 0.0
        %900 = vmatpush1.msra.mxu0 0.0
        %901 = vmatprep.subr.mxu0 0.0
        %902 = vmatpush1.msra.mxu0 0.0
        %903 = vmatprep.subr.mxu0 0.0
        %904 = vmatpush1.msra.mxu0 0.0
        %905 = vmatprep.subr.mxu0 0.0
        %906 = vmatpush1.msra.mxu0 0.0
        %907 = vmatprep.subr.mxu0 0.0
        %908 = vmatpush1.msra.mxu0 0.0
        %909 = vmatprep.subr.mxu0 0.0
        %910 = vmatpush1.msra.mxu0 0.0
        %911 = vmatprep.subr.mxu0 0.0
        %912 = vmatpush1.msra.mxu0 0.0
        %913 = vmatprep.subr.mxu0 0.0
        %914 = vmatpush1.msra.mxu0 0.0
        %915 = vmatprep.subr.mxu0 0.0
        %916 = vmatpush1.msra.mxu0 0.0
        %917 = vmatprep.subr.mxu0 0.0
        %918 = vmatpush1.msra.mxu0 0.0
        %919 = vmatprep.subr.mxu0 0.0
        %920 = vmatpush1.msra.mxu0 0.0
        %921 = vmatprep.subr.mxu0 0.0
        %922 = vmatpush1.msra.mxu0 0.0
        %923 = vmatprep.subr.mxu0 0.0
        %924 = vmatpush1.msra.mxu0 0.0
        %925 = vmatprep.subr.mxu0 0.0
        %926 = vmatpush1.msra.mxu0 0.0
        %927 = vmatprep.mubr.f32.mxu0 0.0
        %928 = vmatmul.mubr.f32.gmra.mrb[0].mxu0 %v858
        %v929 = vpop.f32.mrb[0].mxu0
        %v930 = vadd.f32 0.0, %v929
        %v931 = vpop.f32.mrb[0].mxu0
        %932 = vmatprep.mubr.f32.mxu0 0.0
        %933 = vmatmul.mubr.f32.gmra.mrb[0].mxu0 %v861
        %v934 = vpop.f32.mrb[0].mxu0
        %v935 = vadd.f32 0.0, %v934
        %v936 = vpop.f32.mrb[0].mxu0
        %937 = vdwg.mxu0
        %940 = vrot.lane.b32.xlu0 %v714, 96
        %v941 = vpop.permute.xlu0 %940
        %942 = vrot.lane.b32.xlu0 %v715, 96
        %v943 = vpop.permute.xlu0 %942
        %v946 = vsel %vm716, %v941, 0.0
        %947 = vadd.xlane.f32.xlu0 %v946
        %v948 = vpop.xlane.xlu0 %947
        %v949 = vsel %vm716, %v943, 0.0
        %950 = vadd.xlane.f32.xlu0 %v949
        %v951 = vpop.xlane.xlu0 %950
        %v952 = vmax.f32 %v948, 1e-24
        %v953 = vmax.f32 %v951, 1e-24
        %v954 = vrsqrt.pop %v952
        %v955 = vrsqrt.pop %v953
        %958 = vrot.lane.b32.xlu0 %v727, 96
        %v959 = vpop.permute.xlu0 %958
        %960 = vrot.lane.b32.xlu0 %v728, 96
        %v961 = vpop.permute.xlu0 %960
        %v964 = vsel %vm716, %v959, 0.0
        %965 = vadd.xlane.f32.xlu0 %v964
        %v966 = vpop.xlane.xlu0 %965
        %v967 = vsel %vm716, %v961, 0.0
        %968 = vadd.xlane.f32.xlu0 %v967
        %v969 = vpop.xlane.xlu0 %968
        %v970 = vmax.f32 %v966, 1e-24
        %v971 = vmax.f32 %v969, 1e-24
        %v972 = vrsqrt.pop %v970
        %v973 = vrsqrt.pop %v971
        %s974 = sld [smem:[#allocation2 + $0x1]]
        %v975 = vstv %s974
        %v976 = vmul.f32 %v954, %v975
        %v977 = vmul.f32 %v955, %v975
        %v978 = vmul.f32 %v524, %v976
        %v979 = vmul.f32 %v529, %v977
        %v980 = vmul.f32 %v615, %v972
        %v981 = vmul.f32 %v620, %v973
        %984 = vrot.lane.b32.xlu0 %v978, 96
        %v985 = vpop.permute.xlu0 %984
        %986 = vrot.lane.b32.xlu0 %v979, 96
        %v987 = vpop.permute.xlu0 %986
        %990 = vrot.lane.b32.xlu0 %v980, 96
        %v991 = vpop.permute.xlu0 %990
        %992 = vrot.lane.b32.xlu0 %v981, 96
        %v993 = vpop.permute.xlu0 %992
        %v994 = vsel %vm716, %v985, 0
        %v996 = vsel %vm716, %v987, 0
        %v998 = vsel %vm716, %v991, 0
        %v1000 = vsel %vm716, %v993, 0
        %1002 = vmatprep.subr.mxu0 0.0
        %1003 = vmatpush1.xpose.msra.mxu0 %v998
        %1004 = vmatprep.subr.mxu0 0.0
        %1005 = vmatpush1.xpose.msra.mxu0 %v1000
        %1006 = vmatprep.subr.mxu0 0.0
        %1007 = vmatpush1.xpose.msra.mxu0 0.0
        %1008 = vmatprep.subr.mxu0 0.0
        %1009 = vmatpush1.xpose.msra.mxu0 0.0
        %1010 = vmatprep.subr.mxu0 0.0
        %1011 = vmatpush1.xpose.msra.mxu0 0.0
        %1012 = vmatprep.subr.mxu0 0.0
        %1013 = vmatpush1.xpose.msra.mxu0 0.0
        %1014 = vmatprep.subr.mxu0 0.0
        %1015 = vmatpush1.xpose.msra.mxu0 0.0
        %1016 = vmatprep.subr.mxu0 0.0
        %1017 = vmatpush1.xpose.msra.mxu0 0.0
        %1018 = vmatprep.subr.mxu0 0.0
        %1019 = vmatpush1.xpose.msra.mxu0 0.0
        %1020 = vmatprep.subr.mxu0 0.0
        %1021 = vmatpush1.xpose.msra.mxu0 0.0
        %1022 = vmatprep.subr.mxu0 0.0
        %1023 = vmatpush1.xpose.msra.mxu0 0.0
        %1024 = vmatprep.subr.mxu0 0.0
        %1025 = vmatpush1.xpose.msra.mxu0 0.0
        %1026 = vmatprep.subr.mxu0 0.0
        %1027 = vmatpush1.xpose.msra.mxu0 0.0
        %1028 = vmatprep.subr.mxu0 0.0
        %1029 = vmatpush1.xpose.msra.mxu0 0.0
        %1030 = vmatprep.subr.mxu0 0.0
        %1031 = vmatpush1.xpose.msra.mxu0 0.0
        %1032 = vmatprep.subr.mxu0 0.0
        %1033 = vmatpush1.xpose.msra.mxu0 0.0
        %1034 = vmatprep.subr.mxu0 0.0
        %1035 = vmatpush1.xpose.msra.mxu0 0.0
        %1036 = vmatprep.subr.mxu0 0.0
        %1037 = vmatpush1.xpose.msra.mxu0 0.0
        %1038 = vmatprep.subr.mxu0 0.0
        %1039 = vmatpush1.xpose.msra.mxu0 0.0
        %1040 = vmatprep.subr.mxu0 0.0
        %1041 = vmatpush1.xpose.msra.mxu0 0.0
        %1042 = vmatprep.subr.mxu0 0.0
        %1043 = vmatpush1.xpose.msra.mxu0 0.0
        %1044 = vmatprep.subr.mxu0 0.0
        %1045 = vmatpush1.xpose.msra.mxu0 0.0
        %1046 = vmatprep.subr.mxu0 0.0
        %1047 = vmatpush1.xpose.msra.mxu0 0.0
        %1048 = vmatprep.subr.mxu0 0.0
        %1049 = vmatpush1.xpose.msra.mxu0 0.0
        %1050 = vmatprep.subr.mxu0 0.0
        %1051 = vmatpush1.xpose.msra.mxu0 0.0
        %1052 = vmatprep.subr.mxu0 0.0
        %1053 = vmatpush1.xpose.msra.mxu0 0.0
        %1054 = vmatprep.subr.mxu0 0.0
        %1055 = vmatpush1.xpose.msra.mxu0 0.0
        %1056 = vmatprep.subr.mxu0 0.0
        %1057 = vmatpush1.xpose.msra.mxu0 0.0
        %1058 = vmatprep.subr.mxu0 0.0
        %1059 = vmatpush1.xpose.msra.mxu0 0.0
        %1060 = vmatprep.subr.mxu0 0.0
        %1061 = vmatpush1.xpose.msra.mxu0 0.0
        %1062 = vmatprep.subr.mxu0 0.0
        %1063 = vmatpush1.xpose.msra.mxu0 0.0
        %1064 = vmatprep.subr.mxu0 0.0
        %1065 = vmatpush1.xpose.msra.mxu0 0.0
        %1066 = vmatprep.mubr.f32.mxu0 0.0
        %1067 = vmatmul.mubr.f32.gmra.mrb[0].mxu0 %v994
        %v1068 = vpop.f32.mrb[0].mxu0
        %v1069 = vadd.f32 0.0, %v1068
        %v1070 = vpop.f32.mrb[0].mxu0
        %1071 = vmatprep.mubr.f32.mxu0 0.0
        %1072 = vmatmul.mubr.f32.gmra.mrb[0].mxu0 %v996
        %v1073 = vpop.f32.mrb[0].mxu0
        %v1074 = vadd.f32 0.0, %v1073
        %v1075 = vpop.f32.mrb[0].mxu0
        %1076 = vdwg.mxu0
        %v1077 = vsel %vm834, %v1069, -inf
        %1078 = vmax.xlane.f32.xlu0 %v1077
        %v1079 = vpop.xlane.xlu0 %1078
        %v1080 = vsel %vm834, %v1074, -inf
        %1081 = vmax.xlane.f32.xlu0 %v1080
        %v1082 = vpop.xlane.xlu0 %1081
        %v1083 = vsub.f32 %v1069, %v1079
        %v1084 = vsub.f32 %v1074, %v1082
        %v1085 = vmul.f32 %v1083, 1.442695
        %v1086 = vpow.pop %v1085
        %v1087 = vmul.f32 %v1084, 1.442695
        %v1088 = vpow.pop %v1087
        %v1089 = vsel %vm834, %v1086, 0.0
        %1090 = vadd.xlane.f32.xlu0 %v1089
        %v1091 = vpop.xlane.xlu0 %1090
        %v1092 = vsel %vm834, %v1088, 0.0
        %1093 = vadd.xlane.f32.xlu0 %v1092
        %v1094 = vpop.xlane.xlu0 %1093
        %v1095 = vrcp.pop %v1091
        %v1096 = vrcp.pop %v1094
        %v1097 = vmul.f32 %v1086, %v1095
        %v1098 = vmul.f32 %v1088, %v1096
        %1101 = vrot.lane.b32.xlu0 %v706, 96
        %v1102 = vpop.permute.xlu0 %1101
        %1103 = vrot.lane.b32.xlu0 %v711, 96
        %v1104 = vpop.permute.xlu0 %1103
        %v1108 = vsel %vm834, %v1097, 0
        %v1111 = vsel %vm834, %v1098, 0
        %1113 = vmatprep.subr.mxu0 0.0
        %1114 = vmatpush1.msra.mxu0 %v1102
        %1115 = vmatprep.subr.mxu0 0.0
        %1116 = vmatpush1.msra.mxu0 %v1104
        %1117 = vmatprep.subr.mxu0 0.0
        %1118 = vmatpush1.msra.mxu0 0.0
        %1119 = vmatprep.subr.mxu0 0.0
        %1120 = vmatpush1.msra.mxu0 0.0
        %1121 = vmatprep.subr.mxu0 0.0
        %1122 = vmatpush1.msra.mxu0 0.0
        %1123 = vmatprep.subr.mxu0 0.0
        %1124 = vmatpush1.msra.mxu0 0.0
        %1125 = vmatprep.subr.mxu0 0.0
        %1126 = vmatpush1.msra.mxu0 0.0
        %1127 = vmatprep.subr.mxu0 0.0
        %1128 = vmatpush1.msra.mxu0 0.0
        %1129 = vmatprep.subr.mxu0 0.0
        %1130 = vmatpush1.msra.mxu0 0.0
        %1131 = vmatprep.subr.mxu0 0.0
        %1132 = vmatpush1.msra.mxu0 0.0
        %1133 = vmatprep.subr.mxu0 0.0
        %1134 = vmatpush1.msra.mxu0 0.0
        %1135 = vmatprep.subr.mxu0 0.0
        %1136 = vmatpush1.msra.mxu0 0.0
        %1137 = vmatprep.subr.mxu0 0.0
        %1138 = vmatpush1.msra.mxu0 0.0
        %1139 = vmatprep.subr.mxu0 0.0
        %1140 = vmatpush1.msra.mxu0 0.0
        %1141 = vmatprep.subr.mxu0 0.0
        %1142 = vmatpush1.msra.mxu0 0.0
        %1143 = vmatprep.subr.mxu0 0.0
        %1144 = vmatpush1.msra.mxu0 0.0
        %1145 = vmatprep.subr.mxu0 0.0
        %1146 = vmatpush1.msra.mxu0 0.0
        %1147 = vmatprep.subr.mxu0 0.0
        %1148 = vmatpush1.msra.mxu0 0.0
        %1149 = vmatprep.subr.mxu0 0.0
        %1150 = vmatpush1.msra.mxu0 0.0
        %1151 = vmatprep.subr.mxu0 0.0
        %1152 = vmatpush1.msra.mxu0 0.0
        %1153 = vmatprep.subr.mxu0 0.0
        %1154 = vmatpush1.msra.mxu0 0.0
        %1155 = vmatprep.subr.mxu0 0.0
        %1156 = vmatpush1.msra.mxu0 0.0
        %1157 = vmatprep.subr.mxu0 0.0
        %1158 = vmatpush1.msra.mxu0 0.0
        %1159 = vmatprep.subr.mxu0 0.0
        %1160 = vmatpush1.msra.mxu0 0.0
        %1161 = vmatprep.subr.mxu0 0.0
        %1162 = vmatpush1.msra.mxu0 0.0
        %1163 = vmatprep.subr.mxu0 0.0
        %1164 = vmatpush1.msra.mxu0 0.0
        %1165 = vmatprep.subr.mxu0 0.0
        %1166 = vmatpush1.msra.mxu0 0.0
        %1167 = vmatprep.subr.mxu0 0.0
        %1168 = vmatpush1.msra.mxu0 0.0
        %1169 = vmatprep.subr.mxu0 0.0
        %1170 = vmatpush1.msra.mxu0 0.0
        %1171 = vmatprep.subr.mxu0 0.0
        %1172 = vmatpush1.msra.mxu0 0.0
        %1173 = vmatprep.subr.mxu0 0.0
        %1174 = vmatpush1.msra.mxu0 0.0
        %1175 = vmatprep.subr.mxu0 0.0
        %1176 = vmatpush1.msra.mxu0 0.0
        %1177 = vmatprep.mubr.f32.mxu0 0.0
        %1178 = vmatmul.mubr.f32.gmra.mrb[0].mxu0 %v1108
        %v1179 = vpop.f32.mrb[0].mxu0
        %v1180 = vadd.f32 0.0, %v1179
        %v1181 = vpop.f32.mrb[0].mxu0
        %1182 = vmatprep.mubr.f32.mxu0 0.0
        %1183 = vmatmul.mubr.f32.gmra.mrb[0].mxu0 %v1111
        %v1184 = vpop.f32.mrb[0].mxu0
        %v1185 = vadd.f32 0.0, %v1184
        %v1186 = vpop.f32.mrb[0].mxu0
        %1187 = vdwg.mxu0
        %1188 = vrot.lane.b32.xlu0 %v714, 64
        %v1189 = vpop.permute.xlu0 %1188
        %1190 = vrot.lane.b32.xlu0 %v715, 64
        %v1191 = vpop.permute.xlu0 %1190
        %v1194 = vsel %vm716, %v1189, 0.0
        %1195 = vadd.xlane.f32.xlu0 %v1194
        %v1196 = vpop.xlane.xlu0 %1195
        %v1197 = vsel %vm716, %v1191, 0.0
        %1198 = vadd.xlane.f32.xlu0 %v1197
        %v1199 = vpop.xlane.xlu0 %1198
        %v1200 = vmax.f32 %v1196, 1e-24
        %v1201 = vmax.f32 %v1199, 1e-24
        %v1202 = vrsqrt.pop %v1200
        %v1203 = vrsqrt.pop %v1201
        %1204 = vrot.lane.b32.xlu0 %v727, 64
        %v1205 = vpop.permute.xlu0 %1204
        %1206 = vrot.lane.b32.xlu0 %v728, 64
        %v1207 = vpop.permute.xlu0 %1206
        %v1210 = vsel %vm716, %v1205, 0.0
        %1211 = vadd.xlane.f32.xlu0 %v1210
        %v1212 = vpop.xlane.xlu0 %1211
        %v1213 = vsel %vm716, %v1207, 0.0
        %1214 = vadd.xlane.f32.xlu0 %v1213
        %v1215 = vpop.xlane.xlu0 %1214
        %v1216 = vmax.f32 %v1212, 1e-24
        %v1217 = vmax.f32 %v1215, 1e-24
        %v1218 = vrsqrt.pop %v1216
        %v1219 = vrsqrt.pop %v1217
        %s1220 = sld [smem:[#allocation2 + $0x2]]
        %v1221 = vstv %s1220
        %v1222 = vmul.f32 %v1202, %v1221
        %v1223 = vmul.f32 %v1203, %v1221
        %v1224 = vmul.f32 %v524, %v1222
        %v1225 = vmul.f32 %v529, %v1223
        %v1226 = vmul.f32 %v615, %v1218
        %v1227 = vmul.f32 %v620, %v1219
        %1230 = vrot.lane.b32.xlu0 %v1224, 64
        %v1231 = vpop.permute.xlu0 %1230
        %1232 = vrot.lane.b32.xlu0 %v1225, 64
        %v1233 = vpop.permute.xlu0 %1232
        %1236 = vrot.lane.b32.xlu0 %v1226, 64
        %v1237 = vpop.permute.xlu0 %1236
        %1238 = vrot.lane.b32.xlu0 %v1227, 64
        %v1239 = vpop.permute.xlu0 %1238
        %v1240 = vsel %vm716, %v1231, 0
        %v1242 = vsel %vm716, %v1233, 0
        %v1244 = vsel %vm716, %v1237, 0
        %v1246 = vsel %vm716, %v1239, 0
        %1248 = vmatprep.subr.mxu0 0.0
        %1249 = vmatpush1.xpose.msra.mxu0 %v1244
        %1250 = vmatprep.subr.mxu0 0.0
        %1251 = vmatpush1.xpose.msra.mxu0 %v1246
        %1252 = vmatprep.subr.mxu0 0.0
        %1253 = vmatpush1.xpose.msra.mxu0 0.0
        %1254 = vmatprep.subr.mxu0 0.0
        %1255 = vmatpush1.xpose.msra.mxu0 0.0
        %1256 = vmatprep.subr.mxu0 0.0
        %1257 = vmatpush1.xpose.msra.mxu0 0.0
        %1258 = vmatprep.subr.mxu0 0.0
        %1259 = vmatpush1.xpose.msra.mxu0 0.0
        %1260 = vmatprep.subr.mxu0 0.0
        %1261 = vmatpush1.xpose.msra.mxu0 0.0
        %1262 = vmatprep.subr.mxu0 0.0
        %1263 = vmatpush1.xpose.msra.mxu0 0.0
        %1264 = vmatprep.subr.mxu0 0.0
        %1265 = vmatpush1.xpose.msra.mxu0 0.0
        %1266 = vmatprep.subr.mxu0 0.0
        %1267 = vmatpush1.xpose.msra.mxu0 0.0
        %1268 = vmatprep.subr.mxu0 0.0
        %1269 = vmatpush1.xpose.msra.mxu0 0.0
        %1270 = vmatprep.subr.mxu0 0.0
        %1271 = vmatpush1.xpose.msra.mxu0 0.0
        %1272 = vmatprep.subr.mxu0 0.0
        %1273 = vmatpush1.xpose.msra.mxu0 0.0
        %1274 = vmatprep.subr.mxu0 0.0
        %1275 = vmatpush1.xpose.msra.mxu0 0.0
        %1276 = vmatprep.subr.mxu0 0.0
        %1277 = vmatpush1.xpose.msra.mxu0 0.0
        %1278 = vmatprep.subr.mxu0 0.0
        %1279 = vmatpush1.xpose.msra.mxu0 0.0
        %1280 = vmatprep.subr.mxu0 0.0
        %1281 = vmatpush1.xpose.msra.mxu0 0.0
        %1282 = vmatprep.subr.mxu0 0.0
        %1283 = vmatpush1.xpose.msra.mxu0 0.0
        %1284 = vmatprep.subr.mxu0 0.0
        %1285 = vmatpush1.xpose.msra.mxu0 0.0
        %1286 = vmatprep.subr.mxu0 0.0
        %1287 = vmatpush1.xpose.msra.mxu0 0.0
        %1288 = vmatprep.subr.mxu0 0.0
        %1289 = vmatpush1.xpose.msra.mxu0 0.0
        %1290 = vmatprep.subr.mxu0 0.0
        %1291 = vmatpush1.xpose.msra.mxu0 0.0
        %1292 = vmatprep.subr.mxu0 0.0
        %1293 = vmatpush1.xpose.msra.mxu0 0.0
        %1294 = vmatprep.subr.mxu0 0.0
        %1295 = vmatpush1.xpose.msra.mxu0 0.0
        %1296 = vmatprep.subr.mxu0 0.0
        %1297 = vmatpush1.xpose.msra.mxu0 0.0
        %1298 = vmatprep.subr.mxu0 0.0
        %1299 = vmatpush1.xpose.msra.mxu0 0.0
        %1300 = vmatprep.subr.mxu0 0.0
        %1301 = vmatpush1.xpose.msra.mxu0 0.0
        %1302 = vmatprep.subr.mxu0 0.0
        %1303 = vmatpush1.xpose.msra.mxu0 0.0
        %1304 = vmatprep.subr.mxu0 0.0
        %1305 = vmatpush1.xpose.msra.mxu0 0.0
        %1306 = vmatprep.subr.mxu0 0.0
        %1307 = vmatpush1.xpose.msra.mxu0 0.0
        %1308 = vmatprep.subr.mxu0 0.0
        %1309 = vmatpush1.xpose.msra.mxu0 0.0
        %1310 = vmatprep.subr.mxu0 0.0
        %1311 = vmatpush1.xpose.msra.mxu0 0.0
        %1312 = vmatprep.mubr.f32.mxu0 0.0
        %1313 = vmatmul.mubr.f32.gmra.mrb[0].mxu0 %v1240
        %v1314 = vpop.f32.mrb[0].mxu0
        %v1315 = vadd.f32 0.0, %v1314
        %v1316 = vpop.f32.mrb[0].mxu0
        %1317 = vmatprep.mubr.f32.mxu0 0.0
        %1318 = vmatmul.mubr.f32.gmra.mrb[0].mxu0 %v1242
        %v1319 = vpop.f32.mrb[0].mxu0
        %v1320 = vadd.f32 0.0, %v1319
        %v1321 = vpop.f32.mrb[0].mxu0
        %1322 = vdwg.mxu0
        %v1323 = vsel %vm834, %v1315, -inf
        %1324 = vmax.xlane.f32.xlu0 %v1323
        %v1325 = vpop.xlane.xlu0 %1324
        %v1326 = vsel %vm834, %v1320, -inf
        %1327 = vmax.xlane.f32.xlu0 %v1326
        %v1328 = vpop.xlane.xlu0 %1327
        %v1329 = vsub.f32 %v1315, %v1325
        %v1330 = vsub.f32 %v1320, %v1328
        %v1331 = vmul.f32 %v1329, 1.442695
        %v1332 = vpow.pop %v1331
        %v1333 = vmul.f32 %v1330, 1.442695
        %v1334 = vpow.pop %v1333
        %v1335 = vsel %vm834, %v1332, 0.0
        %1336 = vadd.xlane.f32.xlu0 %v1335
        %v1337 = vpop.xlane.xlu0 %1336
        %v1338 = vsel %vm834, %v1334, 0.0
        %1339 = vadd.xlane.f32.xlu0 %v1338
        %v1340 = vpop.xlane.xlu0 %1339
        %v1341 = vrcp.pop %v1337
        %v1342 = vrcp.pop %v1340
        %v1343 = vmul.f32 %v1332, %v1341
        %v1344 = vmul.f32 %v1334, %v1342
        %1345 = vrot.lane.b32.xlu0 %v706, 64
        %v1346 = vpop.permute.xlu0 %1345
        %1347 = vrot.lane.b32.xlu0 %v711, 64
        %v1348 = vpop.permute.xlu0 %1347
        %v1352 = vsel %vm834, %v1343, 0
        %v1355 = vsel %vm834, %v1344, 0
        %1357 = vmatprep.subr.mxu0 0.0
        %1358 = vmatpush1.msra.mxu0 %v1346
        %1359 = vmatprep.subr.mxu0 0.0
        %1360 = vmatpush1.msra.mxu0 %v1348
        %1361 = vmatprep.subr.mxu0 0.0
        %1362 = vmatpush1.msra.mxu0 0.0
        %1363 = vmatprep.subr.mxu0 0.0
        %1364 = vmatpush1.msra.mxu0 0.0
        %1365 = vmatprep.subr.mxu0 0.0
        %1366 = vmatpush1.msra.mxu0 0.0
        %1367 = vmatprep.subr.mxu0 0.0
        %1368 = vmatpush1.msra.mxu0 0.0
        %1369 = vmatprep.subr.mxu0 0.0
        %1370 = vmatpush1.msra.mxu0 0.0
        %1371 = vmatprep.subr.mxu0 0.0
        %1372 = vmatpush1.msra.mxu0 0.0
        %1373 = vmatprep.subr.mxu0 0.0
        %1374 = vmatpush1.msra.mxu0 0.0
        %1375 = vmatprep.subr.mxu0 0.0
        %1376 = vmatpush1.msra.mxu0 0.0
        %1377 = vmatprep.subr.mxu0 0.0
        %1378 = vmatpush1.msra.mxu0 0.0
        %1379 = vmatprep.subr.mxu0 0.0
        %1380 = vmatpush1.msra.mxu0 0.0
        %1381 = vmatprep.subr.mxu0 0.0
        %1382 = vmatpush1.msra.mxu0 0.0
        %1383 = vmatprep.subr.mxu0 0.0
        %1384 = vmatpush1.msra.mxu0 0.0
        %1385 = vmatprep.subr.mxu0 0.0
        %1386 = vmatpush1.msra.mxu0 0.0
        %1387 = vmatprep.subr.mxu0 0.0
        %1388 = vmatpush1.msra.mxu0 0.0
        %1389 = vmatprep.subr.mxu0 0.0
        %1390 = vmatpush1.msra.mxu0 0.0
        %1391 = vmatprep.subr.mxu0 0.0
        %1392 = vmatpush1.msra.mxu0 0.0
        %1393 = vmatprep.subr.mxu0 0.0
        %1394 = vmatpush1.msra.mxu0 0.0
        %1395 = vmatprep.subr.mxu0 0.0
        %1396 = vmatpush1.msra.mxu0 0.0
        %1397 = vmatprep.subr.mxu0 0.0
        %1398 = vmatpush1.msra.mxu0 0.0
        %1399 = vmatprep.subr.mxu0 0.0
        %1400 = vmatpush1.msra.mxu0 0.0
        %1401 = vmatprep.subr.mxu0 0.0
        %1402 = vmatpush1.msra.mxu0 0.0
        %1403 = vmatprep.subr.mxu0 0.0
        %1404 = vmatpush1.msra.mxu0 0.0
        %1405 = vmatprep.subr.mxu0 0.0
        %1406 = vmatpush1.msra.mxu0 0.0
        %1407 = vmatprep.subr.mxu0 0.0
        %1408 = vmatpush1.msra.mxu0 0.0
        %1409 = vmatprep.subr.mxu0 0.0
        %1410 = vmatpush1.msra.mxu0 0.0
        %1411 = vmatprep.subr.mxu0 0.0
        %1412 = vmatpush1.msra.mxu0 0.0
        %1413 = vmatprep.subr.mxu0 0.0
        %1414 = vmatpush1.msra.mxu0 0.0
        %1415 = vmatprep.subr.mxu0 0.0
        %1416 = vmatpush1.msra.mxu0 0.0
        %1417 = vmatprep.subr.mxu0 0.0
        %1418 = vmatpush1.msra.mxu0 0.0
        %1419 = vmatprep.subr.mxu0 0.0
        %1420 = vmatpush1.msra.mxu0 0.0
        %1421 = vmatprep.mubr.f32.mxu0 0.0
        %1422 = vmatmul.mubr.f32.gmra.mrb[0].mxu0 %v1352
        %v1423 = vpop.f32.mrb[0].mxu0
        %v1424 = vadd.f32 0.0, %v1423
        %v1425 = vpop.f32.mrb[0].mxu0
        %1426 = vmatprep.mubr.f32.mxu0 0.0
        %1427 = vmatmul.mubr.f32.gmra.mrb[0].mxu0 %v1355
        %v1428 = vpop.f32.mrb[0].mxu0
        %v1429 = vadd.f32 0.0, %v1428
        %v1430 = vpop.f32.mrb[0].mxu0
        %1431 = vdwg.mxu0
        %1432 = vrot.lane.b32.xlu0 %v714, 32
        %v1433 = vpop.permute.xlu0 %1432
        %1434 = vrot.lane.b32.xlu0 %v715, 32
        %v1435 = vpop.permute.xlu0 %1434
        %v1438 = vsel %vm716, %v1433, 0.0
        %1439 = vadd.xlane.f32.xlu0 %v1438
        %v1440 = vpop.xlane.xlu0 %1439
        %v1441 = vsel %vm716, %v1435, 0.0
        %1442 = vadd.xlane.f32.xlu0 %v1441
        %v1443 = vpop.xlane.xlu0 %1442
        %v1444 = vmax.f32 %v1440, 1e-24
        %v1445 = vmax.f32 %v1443, 1e-24
        %v1446 = vrsqrt.pop %v1444
        %v1447 = vrsqrt.pop %v1445
        %1448 = vrot.lane.b32.xlu0 %v727, 32
        %v1449 = vpop.permute.xlu0 %1448
        %1450 = vrot.lane.b32.xlu0 %v728, 32
        %v1451 = vpop.permute.xlu0 %1450
        %v1454 = vsel %vm716, %v1449, 0.0
        %1455 = vadd.xlane.f32.xlu0 %v1454
        %v1456 = vpop.xlane.xlu0 %1455
        %v1457 = vsel %vm716, %v1451, 0.0
        %1458 = vadd.xlane.f32.xlu0 %v1457
        %v1459 = vpop.xlane.xlu0 %1458
        %v1460 = vmax.f32 %v1456, 1e-24
        %v1461 = vmax.f32 %v1459, 1e-24
        %v1462 = vrsqrt.pop %v1460
        %v1463 = vrsqrt.pop %v1461
        %s1464 = sld [smem:[#allocation2 + $0x3]]
        %v1465 = vstv %s1464
        %v1466 = vmul.f32 %v1446, %v1465
        %v1467 = vmul.f32 %v1447, %v1465
        %v1468 = vmul.f32 %v524, %v1466
        %v1469 = vmul.f32 %v529, %v1467
        %v1470 = vmul.f32 %v615, %v1462
        %v1471 = vmul.f32 %v620, %v1463
        %1474 = vrot.lane.b32.xlu0 %v1468, 32
        %v1475 = vpop.permute.xlu0 %1474
        %1476 = vrot.lane.b32.xlu0 %v1469, 32
        %v1477 = vpop.permute.xlu0 %1476
        %1480 = vrot.lane.b32.xlu0 %v1470, 32
        %v1481 = vpop.permute.xlu0 %1480
        %1482 = vrot.lane.b32.xlu0 %v1471, 32
        %v1483 = vpop.permute.xlu0 %1482
        %v1484 = vsel %vm716, %v1475, 0
        %v1486 = vsel %vm716, %v1477, 0
        %v1488 = vsel %vm716, %v1481, 0
        %v1490 = vsel %vm716, %v1483, 0
        %1492 = vmatprep.subr.mxu0 0.0
        %1493 = vmatpush1.xpose.msra.mxu0 %v1488
        %1494 = vmatprep.subr.mxu0 0.0
        %1495 = vmatpush1.xpose.msra.mxu0 %v1490
        %1496 = vmatprep.subr.mxu0 0.0
        %1497 = vmatpush1.xpose.msra.mxu0 0.0
        %1498 = vmatprep.subr.mxu0 0.0
        %1499 = vmatpush1.xpose.msra.mxu0 0.0
        %1500 = vmatprep.subr.mxu0 0.0
        %1501 = vmatpush1.xpose.msra.mxu0 0.0
        %1502 = vmatprep.subr.mxu0 0.0
        %1503 = vmatpush1.xpose.msra.mxu0 0.0
        %1504 = vmatprep.subr.mxu0 0.0
        %1505 = vmatpush1.xpose.msra.mxu0 0.0
        %1506 = vmatprep.subr.mxu0 0.0
        %1507 = vmatpush1.xpose.msra.mxu0 0.0
        %1508 = vmatprep.subr.mxu0 0.0
        %1509 = vmatpush1.xpose.msra.mxu0 0.0
        %1510 = vmatprep.subr.mxu0 0.0
        %1511 = vmatpush1.xpose.msra.mxu0 0.0
        %1512 = vmatprep.subr.mxu0 0.0
        %1513 = vmatpush1.xpose.msra.mxu0 0.0
        %1514 = vmatprep.subr.mxu0 0.0
        %1515 = vmatpush1.xpose.msra.mxu0 0.0
        %1516 = vmatprep.subr.mxu0 0.0
        %1517 = vmatpush1.xpose.msra.mxu0 0.0
        %1518 = vmatprep.subr.mxu0 0.0
        %1519 = vmatpush1.xpose.msra.mxu0 0.0
        %1520 = vmatprep.subr.mxu0 0.0
        %1521 = vmatpush1.xpose.msra.mxu0 0.0
        %1522 = vmatprep.subr.mxu0 0.0
        %1523 = vmatpush1.xpose.msra.mxu0 0.0
        %1524 = vmatprep.subr.mxu0 0.0
        %1525 = vmatpush1.xpose.msra.mxu0 0.0
        %1526 = vmatprep.subr.mxu0 0.0
        %1527 = vmatpush1.xpose.msra.mxu0 0.0
        %1528 = vmatprep.subr.mxu0 0.0
        %1529 = vmatpush1.xpose.msra.mxu0 0.0
        %1530 = vmatprep.subr.mxu0 0.0
        %1531 = vmatpush1.xpose.msra.mxu0 0.0
        %1532 = vmatprep.subr.mxu0 0.0
        %1533 = vmatpush1.xpose.msra.mxu0 0.0
        %1534 = vmatprep.subr.mxu0 0.0
        %1535 = vmatpush1.xpose.msra.mxu0 0.0
        %1536 = vmatprep.subr.mxu0 0.0
        %1537 = vmatpush1.xpose.msra.mxu0 0.0
        %1538 = vmatprep.subr.mxu0 0.0
        %1539 = vmatpush1.xpose.msra.mxu0 0.0
        %1540 = vmatprep.subr.mxu0 0.0
        %1541 = vmatpush1.xpose.msra.mxu0 0.0
        %1542 = vmatprep.subr.mxu0 0.0
        %1543 = vmatpush1.xpose.msra.mxu0 0.0
        %1544 = vmatprep.subr.mxu0 0.0
        %1545 = vmatpush1.xpose.msra.mxu0 0.0
        %1546 = vmatprep.subr.mxu0 0.0
        %1547 = vmatpush1.xpose.msra.mxu0 0.0
        %1548 = vmatprep.subr.mxu0 0.0
        %1549 = vmatpush1.xpose.msra.mxu0 0.0
        %1550 = vmatprep.subr.mxu0 0.0
        %1551 = vmatpush1.xpose.msra.mxu0 0.0
        %1552 = vmatprep.subr.mxu0 0.0
        %1553 = vmatpush1.xpose.msra.mxu0 0.0
        %1554 = vmatprep.subr.mxu0 0.0
        %1555 = vmatpush1.xpose.msra.mxu0 0.0
        %1556 = vmatprep.mubr.f32.mxu0 0.0
        %1557 = vmatmul.mubr.f32.gmra.mrb[0].mxu0 %v1484
        %v1558 = vpop.f32.mrb[0].mxu0
        %v1559 = vadd.f32 0.0, %v1558
        %v1560 = vpop.f32.mrb[0].mxu0
        %1561 = vmatprep.mubr.f32.mxu0 0.0
        %1562 = vmatmul.mubr.f32.gmra.mrb[0].mxu0 %v1486
        %v1563 = vpop.f32.mrb[0].mxu0
        %v1564 = vadd.f32 0.0, %v1563
        %v1565 = vpop.f32.mrb[0].mxu0
        %1566 = vdwg.mxu0
        %v1567 = vsel %vm834, %v1559, -inf
        %1568 = vmax.xlane.f32.xlu0 %v1567
        %v1569 = vpop.xlane.xlu0 %1568
        %v1570 = vsel %vm834, %v1564, -inf
        %1571 = vmax.xlane.f32.xlu0 %v1570
        %v1572 = vpop.xlane.xlu0 %1571
        %v1573 = vsub.f32 %v1559, %v1569
        %v1574 = vsub.f32 %v1564, %v1572
        %v1575 = vmul.f32 %v1573, 1.442695
        %v1576 = vpow.pop %v1575
        %v1577 = vmul.f32 %v1574, 1.442695
        %v1578 = vpow.pop %v1577
        %v1579 = vsel %vm834, %v1576, 0.0
        %1580 = vadd.xlane.f32.xlu0 %v1579
        %v1581 = vpop.xlane.xlu0 %1580
        %v1582 = vsel %vm834, %v1578, 0.0
        %1583 = vadd.xlane.f32.xlu0 %v1582
        %v1584 = vpop.xlane.xlu0 %1583
        %v1585 = vrcp.pop %v1581
        %v1586 = vrcp.pop %v1584
        %v1587 = vmul.f32 %v1576, %v1585
        %v1588 = vmul.f32 %v1578, %v1586
        %1589 = vrot.lane.b32.xlu0 %v706, 32
        %v1590 = vpop.permute.xlu0 %1589
        %1591 = vrot.lane.b32.xlu0 %v711, 32
        %v1592 = vpop.permute.xlu0 %1591
        %v1596 = vsel %vm834, %v1587, 0
        %v1599 = vsel %vm834, %v1588, 0
        %1601 = vmatprep.subr.mxu0 0.0
        %1602 = vmatpush1.msra.mxu0 %v1590
        %1603 = vmatprep.subr.mxu0 0.0
        %1604 = vmatpush1.msra.mxu0 %v1592
        %1605 = vmatprep.subr.mxu0 0.0
        %1606 = vmatpush1.msra.mxu0 0.0
        %1607 = vmatprep.subr.mxu0 0.0
        %1608 = vmatpush1.msra.mxu0 0.0
        %1609 = vmatprep.subr.mxu0 0.0
        %1610 = vmatpush1.msra.mxu0 0.0
        %1611 = vmatprep.subr.mxu0 0.0
        %1612 = vmatpush1.msra.mxu0 0.0
        %1613 = vmatprep.subr.mxu0 0.0
        %1614 = vmatpush1.msra.mxu0 0.0
        %1615 = vmatprep.subr.mxu0 0.0
        %1616 = vmatpush1.msra.mxu0 0.0
        %1617 = vmatprep.subr.mxu0 0.0
        %1618 = vmatpush1.msra.mxu0 0.0
        %1619 = vmatprep.subr.mxu0 0.0
        %1620 = vmatpush1.msra.mxu0 0.0
        %1621 = vmatprep.subr.mxu0 0.0
        %1622 = vmatpush1.msra.mxu0 0.0
        %1623 = vmatprep.subr.mxu0 0.0
        %1624 = vmatpush1.msra.mxu0 0.0
        %1625 = vmatprep.subr.mxu0 0.0
        %1626 = vmatpush1.msra.mxu0 0.0
        %1627 = vmatprep.subr.mxu0 0.0
        %1628 = vmatpush1.msra.mxu0 0.0
        %1629 = vmatprep.subr.mxu0 0.0
        %1630 = vmatpush1.msra.mxu0 0.0
        %1631 = vmatprep.subr.mxu0 0.0
        %1632 = vmatpush1.msra.mxu0 0.0
        %1633 = vmatprep.subr.mxu0 0.0
        %1634 = vmatpush1.msra.mxu0 0.0
        %1635 = vmatprep.subr.mxu0 0.0
        %1636 = vmatpush1.msra.mxu0 0.0
        %1637 = vmatprep.subr.mxu0 0.0
        %1638 = vmatpush1.msra.mxu0 0.0
        %1639 = vmatprep.subr.mxu0 0.0
        %1640 = vmatpush1.msra.mxu0 0.0
        %1641 = vmatprep.subr.mxu0 0.0
        %1642 = vmatpush1.msra.mxu0 0.0
        %1643 = vmatprep.subr.mxu0 0.0
        %1644 = vmatpush1.msra.mxu0 0.0
        %1645 = vmatprep.subr.mxu0 0.0
        %1646 = vmatpush1.msra.mxu0 0.0
        %1647 = vmatprep.subr.mxu0 0.0
        %1648 = vmatpush1.msra.mxu0 0.0
        %1649 = vmatprep.subr.mxu0 0.0
        %1650 = vmatpush1.msra.mxu0 0.0
        %1651 = vmatprep.subr.mxu0 0.0
        %1652 = vmatpush1.msra.mxu0 0.0
        %1653 = vmatprep.subr.mxu0 0.0
        %1654 = vmatpush1.msra.mxu0 0.0
        %1655 = vmatprep.subr.mxu0 0.0
        %1656 = vmatpush1.msra.mxu0 0.0
        %1657 = vmatprep.subr.mxu0 0.0
        %1658 = vmatpush1.msra.mxu0 0.0
        %1659 = vmatprep.subr.mxu0 0.0
        %1660 = vmatpush1.msra.mxu0 0.0
        %1661 = vmatprep.subr.mxu0 0.0
        %1662 = vmatpush1.msra.mxu0 0.0
        %1663 = vmatprep.subr.mxu0 0.0
        %1664 = vmatpush1.msra.mxu0 0.0
        %1665 = vmatprep.mubr.f32.mxu0 0.0
        %1666 = vmatmul.mubr.f32.gmra.mrb[0].mxu0 %v1596
        %v1667 = vpop.f32.mrb[0].mxu0
        %v1668 = vadd.f32 0.0, %v1667
        %v1669 = vpop.f32.mrb[0].mxu0
        %1670 = vmatprep.mubr.f32.mxu0 0.0
        %1671 = vmatmul.mubr.f32.gmra.mrb[0].mxu0 %v1599
        %v1672 = vpop.f32.mrb[0].mxu0
        %v1673 = vadd.f32 0.0, %v1672
        %v1674 = vpop.f32.mrb[0].mxu0
        %1675 = vdwg.mxu0
        %1678 = vrot.lane.b32.xlu0 %v1180, 32
        %v1679 = vpop.permute.xlu0 %1678
        %1680 = vrot.lane.b32.xlu0 %v1185, 32
        %v1681 = vpop.permute.xlu0 %1680
        %1686 = vrot.lane.b32.xlu0 %v1424, 64
        %v1687 = vpop.permute.xlu0 %1686
        %1688 = vrot.lane.b32.xlu0 %v1429, 64
        %v1689 = vpop.permute.xlu0 %1688
        %1694 = vrot.lane.b32.xlu0 %v1668, 96
        %v1695 = vpop.permute.xlu0 %1694
        %1696 = vrot.lane.b32.xlu0 %v1673, 96
        %v1697 = vpop.permute.xlu0 %1696
        %v1700 = vsel %vm716, %v930, %v1679
        %v1701 = vsel %vm716, %v935, %v1681
        %v1702 = vsel %vm450, %v1700, %v1687
        %v1703 = vsel %vm450, %v1701, %v1689
        %vm1704 = vcmask 785408
        %v1705 = vsel %vm1704, %v1702, %v1695
        %v1706 = vsel %vm1704, %v1703, %v1697
        %v1707 = vld [vmem:[%s7] sm:$0xff]
        %v1708 = vld [vmem:[%s7 + $0x8] sm:$0xff]
        %v1709 = vld [vmem:[%s7 + $0x10] sm:$0xff]
        %v1710 = vld [vmem:[%s7 + $0x18] sm:$0xff]
        %v1711 = vld [vmem:[%s7 + $0x20] sm:$0xff]
        %v1712 = vld [vmem:[%s7 + $0x28] sm:$0xff]
        %v1713 = vld [vmem:[%s7 + $0x30] sm:$0xff]
        %v1714 = vld [vmem:[%s7 + $0x38] sm:$0xff]
        %v1715 = vld [vmem:[%s7 + $0x40] sm:$0xff]
        %v1716 = vld [vmem:[%s7 + $0x48] sm:$0xff]
        %v1717 = vld [vmem:[%s7 + $0x50] sm:$0xff]
        %v1718 = vld [vmem:[%s7 + $0x58] sm:$0xff]
        %v1719 = vld [vmem:[%s7 + $0x60] sm:$0xff]
        %v1720 = vld [vmem:[%s7 + $0x68] sm:$0xff]
        %v1721 = vld [vmem:[%s7 + $0x70] sm:$0xff]
        %v1722 = vld [vmem:[%s7 + $0x78] sm:$0xff]
        %v1723 = vld [vmem:[%s8] sm:$0x1]
        %v1725 = vlaneseq
        %v1726 = vshrl.u32 %v1725, 7
        %v1727 = vsub.s32 0, %v1726
        %v1728 = vrot.slane %v1723, %v1727
        %1730 = vmatprep.subr.mxu0 0.0
        %1731 = vmatpush1.msra.mxu0 %v1707
        %1732 = vmatprep.subr.mxu0 0.0
        %1733 = vmatpush1.msra.mxu0 %v1708
        %1734 = vmatprep.subr.mxu0 0.0
        %1735 = vmatpush1.msra.mxu0 %v1709
        %1736 = vmatprep.subr.mxu0 0.0
        %1737 = vmatpush1.msra.mxu0 %v1710
        %1738 = vmatprep.subr.mxu0 0.0
        %1739 = vmatpush1.msra.mxu0 %v1711
        %1740 = vmatprep.subr.mxu0 0.0
        %1741 = vmatpush1.msra.mxu0 %v1712
        %1742 = vmatprep.subr.mxu0 0.0
        %1743 = vmatpush1.msra.mxu0 %v1713
        %1744 = vmatprep.subr.mxu0 0.0
        %1745 = vmatpush1.msra.mxu0 %v1714
        %1746 = vmatprep.subr.mxu0 0.0
        %1747 = vmatpush1.msra.mxu0 %v1715
        %1748 = vmatprep.subr.mxu0 0.0
        %1749 = vmatpush1.msra.mxu0 %v1716
        %1750 = vmatprep.subr.mxu0 0.0
        %1751 = vmatpush1.msra.mxu0 %v1717
        %1752 = vmatprep.subr.mxu0 0.0
        %1753 = vmatpush1.msra.mxu0 %v1718
        %1754 = vmatprep.subr.mxu0 0.0
        %1755 = vmatpush1.msra.mxu0 %v1719
        %1756 = vmatprep.subr.mxu0 0.0
        %1757 = vmatpush1.msra.mxu0 %v1720
        %1758 = vmatprep.subr.mxu0 0.0
        %1759 = vmatpush1.msra.mxu0 %v1721
        %1760 = vmatprep.subr.mxu0 0.0
        %1761 = vmatpush1.msra.mxu0 %v1722
        %1762 = vmatprep.subr.mxu0 0.0
        %1763 = vmatpush1.msra.mxu0 0.0
        %1764 = vmatprep.subr.mxu0 0.0
        %1765 = vmatpush1.msra.mxu0 0.0
        %1766 = vmatprep.subr.mxu0 0.0
        %1767 = vmatpush1.msra.mxu0 0.0
        %1768 = vmatprep.subr.mxu0 0.0
        %1769 = vmatpush1.msra.mxu0 0.0
        %1770 = vmatprep.subr.mxu0 0.0
        %1771 = vmatpush1.msra.mxu0 0.0
        %1772 = vmatprep.subr.mxu0 0.0
        %1773 = vmatpush1.msra.mxu0 0.0
        %1774 = vmatprep.subr.mxu0 0.0
        %1775 = vmatpush1.msra.mxu0 0.0
        %1776 = vmatprep.subr.mxu0 0.0
        %1777 = vmatpush1.msra.mxu0 0.0
        %1778 = vmatprep.subr.mxu0 0.0
        %1779 = vmatpush1.msra.mxu0 0.0
        %1780 = vmatprep.subr.mxu0 0.0
        %1781 = vmatpush1.msra.mxu0 0.0
        %1782 = vmatprep.subr.mxu0 0.0
        %1783 = vmatpush1.msra.mxu0 0.0
        %1784 = vmatprep.subr.mxu0 0.0
        %1785 = vmatpush1.msra.mxu0 0.0
        %1786 = vmatprep.subr.mxu0 0.0
        %1787 = vmatpush1.msra.mxu0 0.0
        %1788 = vmatprep.subr.mxu0 0.0
        %1789 = vmatpush1.msra.mxu0 0.0
        %1790 = vmatprep.subr.mxu0 0.0
        %1791 = vmatpush1.msra.mxu0 0.0
        %1792 = vmatprep.subr.mxu0 0.0
        %1793 = vmatpush1.msra.mxu0 0.0
        %1794 = vmatprep.mubr.f32.mxu0 0.0
        %1795 = vmatmul.mubr.f32.gmra.mrb[0].mxu0 %v1705
        %v1796 = vpop.f32.mrb[0].mxu0
        %v1797 = vadd.f32 %v1728, %v1796
        %v1798 = vpop.f32.mrb[0].mxu0
        %1799 = vmatprep.mubr.f32.mxu0 0.0
        %1800 = vmatmul.mubr.f32.gmra.mrb[0].mxu0 %v1706
        %v1801 = vpop.f32.mrb[0].mxu0
        %v1802 = vadd.f32 %v1728, %v1801
        %v1803 = vpop.f32.mrb[0].mxu0
        %1804 = vdwg.mxu0
        %1805 = vst.msk [vmem:[%s439] sm:$0xff] %vm450, %v1797
        %1806 = vst.msk [vmem:[%s439 + $0x8] sm:$0xff] %vm450, %v1802
        %s1807 = sand.u32 %s242, 1
        %s1808 = scalar_lea.sflag [#allocation4], %s1807
        %s1809 = sand.u32 %s242, 1
        %s1810 = smul.addr %s1809, 16
        %s1811 = scalar_lea.vmem [#allocation10], %s1810
        // Predicated region
        $region73: #{tpu_custom_call.1} parent=55 // pred_check
          %p1812 = pneg %p252
        $region74: #{tpu_custom_call.1} parent=55 // pred_check_branch
          %1814 = sbr.rel (%p1812) target = $region76
        $region75: #{tpu_custom_call.1} parent=55 // pred_region
          %s1816 = ssub.s32 256, 256
          %1817 = vsyncadd %s1808, %s1816
          %s1818 = smul.addr %s30, 2
          %s1819 = smul.addr %s1818, 128
          %s1820 = scalar_lea.hbm %s9, %s1819
          %s1821 = sshll.u32 %s1811, 4
          %s1822 = int_to_ptr.vmem [resolvable:$true] %s1821
          %1827 = dma.vmem_to_hbm [thread:$0]  %s1822, 256, %s1820, %s1808, 128, 128, 8
        $region76: #{tpu_custom_call.1} parent=55 // pred_fallthru
          _
      $region56: #{tpu_custom_call.1} parent=5 // pred_fallthru
        _
      %p1828 = scmp.le.s32.totalorder 2, %s25
      // Predicated region
      $region77: #{tpu_custom_call.1} parent=5 // pred_check
        %p1829 = pneg %p1828
      $region78: #{tpu_custom_call.1} parent=5 // pred_check_branch
        %1831 = sbr.rel (%p1829) target = $region80
      $region79: #{tpu_custom_call.1} parent=5 // pred_region
        %s1832 = ssub.s32 %s25, 2
        // Predicated region
        $region81: #{tpu_custom_call.1} parent=79 // pred_check
          %p1833 = pneg %p258
        $region82: #{tpu_custom_call.1} parent=79 // pred_check_branch
          %1835 = sbr.rel (%p1833) target = $region84
        $region83: #{tpu_custom_call.1} parent=79 // pred_region
          %s1836 = sand.u32 %s243, 1
          %s1837 = scalar_lea.sflag [#allocation4], %s1836
          %s1838 = sand.u32 %s243, 1
          %s1839 = smul.addr %s1838, 16
          %s1840 = scalar_lea.vmem [#allocation10], %s1839
          %1841 = dma.done %s1837, 256
        $region84: #{tpu_custom_call.1} parent=79 // pred_fallthru
          _
      $region80: #{tpu_custom_call.1} parent=5 // pred_fallthru
        _
    $region6: #{tpu_custom_call.1} parent=1 // loop_footer
      %s29 = sadd.s32 1, %s25
    $region7: #{tpu_custom_call.1} parent=1 // loop_footer_branch
      %24 = sbr.rel target = $region3
    $region8: #{tpu_custom_call.1} parent=1 // loop_exit
      _
    %1842 = vsyncpa [#allocation3], 1
    %s1843 = scalar_lea.sflag [#allocation3], 1
    %1844 = vsyncpa %s1843, 1
    %1845 = vsyncpa [#allocation8], 1
    %s1846 = scalar_lea.sflag [#allocation8], 1
    %1847 = vsyncpa %s1846, 1
    %1848 = vsyncpa [#allocation4], 1
    %s1849 = scalar_lea.sflag [#allocation4], 1
    %1850 = vsyncpa %s1849, 1
    %1851 = vsyncpa [#allocation5], 1
    %s1852 = scalar_lea.sflag [#allocation5], 1
    %1853 = vsyncpa %s1852, 1

</llo_original>
